<compile_context>
chip_gen: v7x
topology: tpu7x:2x2x1
jax: 0.10.0
libtpu: 0.0.40
codegen_flags: <defaults>
</compile_context>

<pallas_src>
import functools

import jax
import jax.numpy as jnp
from jax.experimental import pallas as pl
from jax.experimental.pallas import tpu as pltpu


# ---------------------------------------------------------------------------
# Fused kernel: one encoder layer per grid step; (S,D) activation resident.
# ---------------------------------------------------------------------------
def encoder_tf_kernel(embx_ref, wqkv_ref, bqkv_ref, wo_ref,
                      w1_ref, b1_ref, w2_ref, bvec_ref, out_ref,
                      *, num_heads):
    l = pl.program_id(0)
    H = num_heads
    S, D = out_ref.shape
    dh = D // H
    scale = 1.0 / float(dh) ** 0.5
    eps = 1e-5

    # Layer 0: seed the resident activation with the (XLA-gathered) embedding.
    @pl.when(l == 0)
    def _():
        out_ref[...] = embx_ref[...]

    x = out_ref[...]                                   # (S, D) f32, resident
    xb = x.astype(jnp.bfloat16)

    # ---- fused, lane-dense QKV projection: (S,D) @ (D,3D) -> (S,3D) f32 ----
    qkv = jnp.dot(xb, wqkv_ref[...], preferred_element_type=jnp.float32)
    qkv = qkv + bqkv_ref[...]                          # (1, 3D) bias, one add

    # Fold 1/sqrt(dh) into q AFTER the bias add (PyTorch MHA semantics).
    q = qkv[:, 0:D] * scale                            # (S, D) f32
    k = qkv[:, D:2 * D]
    v = qkv[:, 2 * D:3 * D]

    # Head split: static lane slices stacked on a leading batch dim (f32
    # relayout, then a single elementwise bf16 cast per tensor).
    qh = jnp.stack([q[:, h * dh:(h + 1) * dh] for h in range(H)],
                   axis=0).astype(jnp.bfloat16)        # (H, S, dh)
    kh = jnp.stack([k[:, h * dh:(h + 1) * dh] for h in range(H)],
                   axis=0).astype(jnp.bfloat16)
    vh = jnp.stack([v[:, h * dh:(h + 1) * dh] for h in range(H)],
                   axis=0).astype(jnp.bfloat16)

    # ---- batched attention core (heads on the leading batch dim) ----------
    s = jnp.einsum('hqd,hkd->hqk', qh, kh,
                   preferred_element_type=jnp.float32)     # (H, S, S)
    s = s - jnp.max(s, axis=-1, keepdims=True)
    p = jnp.exp(s)
    p = p * pl.reciprocal(jnp.sum(p, axis=-1, keepdims=True), approx=True)

    ctx = jnp.einsum('hqk,hkd->hqd', p.astype(jnp.bfloat16), vh,
                     preferred_element_type=jnp.float32)   # (H, S, dh) f32

    # ---- head recombination folded into ONE full-K output projection ------
    ctx2 = jnp.concatenate([ctx[h] for h in range(H)], axis=-1)  # (S, D) f32
    bvec = bvec_ref[...]                                         # (6, D) f32
    attn = jnp.dot(ctx2.astype(jnp.bfloat16), wo_ref[...],
                   preferred_element_type=jnp.float32) + bvec[0:1, :]

    # ---- residual + LayerNorm 1 (f32) --------------------------------------
    y = x + attn
    mu = jnp.mean(y, axis=-1, keepdims=True)
    yc = y - mu
    var = jnp.mean(yc * yc, axis=-1, keepdims=True)
    y = yc * jax.lax.rsqrt(var + eps) * bvec[2:3, :] + bvec[3:4, :]

    # ---- feed-forward (ReLU), bf16 matmuls / f32 accumulation --------------
    h1 = jnp.dot(y.astype(jnp.bfloat16), w1_ref[...],
                 preferred_element_type=jnp.float32) + b1_ref[...]
    h1 = jnp.maximum(h1, 0.0)
    ffn = jnp.dot(h1.astype(jnp.bfloat16), w2_ref[...],
                  preferred_element_type=jnp.float32) + bvec[1:2, :]

    # ---- residual + LayerNorm 2 (f32) --------------------------------------
    z = y + ffn
    mu2 = jnp.mean(z, axis=-1, keepdims=True)
    zc = z - mu2
    var2 = jnp.mean(zc * zc, axis=-1, keepdims=True)
    out_ref[...] = (zc * jax.lax.rsqrt(var2 + eps) * bvec[4:5, :]
                    + bvec[5:6, :]).astype(out_ref.dtype)


# ---------------------------------------------------------------------------
# VMEM limit: leave headroom below physical capacity (v7x = 64 MiB) and be
# generous (up to ~100 MiB) on v5e/v6e (128 MiB).
# ---------------------------------------------------------------------------
def _vmem_limit_bytes():
    cap = 128 * 1024 * 1024
    try:
        cap = int(getattr(pltpu.get_tpu_info(), "vmem_capacity_bytes", cap))
    except Exception:
        pass
    return int(max(32 * 1024 * 1024,
                   min(cap - 16 * 1024 * 1024, 100 * 1024 * 1024)))


# ---------------------------------------------------------------------------
# Wrapper: XLA embedding gather + one pallas_call for the encoder stack.
# ---------------------------------------------------------------------------
def encoder_tf_forward(input_ids, hidden, packed, num_heads):
    """input_ids: (S, 1) int32 token ids (PyTorch input of shape (S, B=1)).
    `hidden` is ignored, exactly as in the PyTorch module."""
    del hidden
    S = input_ids.shape[0]
    L, D, threeD = packed["wqkv"].shape
    assert threeD == 3 * D
    F = packed["w1"].shape[-1]
    H = num_heads
    dh = D // H
    assert D == H * dh

    ids = input_ids.reshape(S).astype(jnp.int32)
    # Embedding lookup stays in XLA (plain gather); only the (S,D) activation
    # enters the kernel.  The (V,D) table never touches kernel VMEM.
    emb_x = jnp.take(packed["emb"], ids, axis=0).astype(jnp.float32)   # (S, D)

    args = (emb_x, packed["wqkv"], packed["bqkv"], packed["wo"],
            packed["w1"], packed["b1"], packed["w2"], packed["bvec"])

    flops_layer = (2 * S * D * 3 * D            # fused QKV projection
                   + 2 * H * S * S * dh * 2     # scores + context
                   + 2 * S * D * D              # output projection
                   + 2 * S * D * F * 2)         # FFN (two matmuls)
    cost = pl.CostEstimate(
        flops=int(L * flops_layer),
        transcendentals=int(L * H * S * S),
        bytes_accessed=int(sum(a.size * a.dtype.itemsize for a in args)
                           + S * D * 4))

    grid_spec = pltpu.PrefetchScalarGridSpec(
        num_scalar_prefetch=0,
        grid=(L,),
        in_specs=[
            pl.BlockSpec((S, D), lambda l: (0, 0)),                  # embedded x
            pl.BlockSpec((None, D, 3 * D), lambda l: (l, 0, 0)),     # wqkv
            pl.BlockSpec((None, 1, 3 * D), lambda l: (l, 0, 0)),     # bqkv
            pl.BlockSpec((None, D, D), lambda l: (l, 0, 0)),         # wo
            pl.BlockSpec((None, D, F), lambda l: (l, 0, 0)),         # w1
            pl.BlockSpec((None, 1, F), lambda l: (l, 0, 0)),         # b1
            pl.BlockSpec((None, F, D), lambda l: (l, 0, 0)),         # w2
            pl.BlockSpec((None, 6, D), lambda l: (l, 0, 0)),         # packed vecs
        ],
        out_specs=pl.BlockSpec((S, D), lambda l: (0, 0)),  # resident across layers
    )

    return pl.pallas_call(
        functools.partial(encoder_tf_kernel, num_heads=H),
        grid_spec=grid_spec,
        out_shape=jax.ShapeDtypeStruct((S, D), jnp.float32),
        compiler_params=pltpu.CompilerParams(
            dimension_semantics=("arbitrary",),     # sequential layer dependence
            vmem_limit_bytes=_vmem_limit_bytes()),
        cost_estimate=cost,
    )(*args)


# ---------------------------------------------------------------------------
# Parameter construction (deterministic, synthetic — no checkpoint)
# ---------------------------------------------------------------------------
def init_params(key, input_size, D, F, n_layers):
    keys = jax.random.split(key, 1 + n_layers)
    params = {"embedding": jax.random.normal(keys[0], (input_size, D),
                                             jnp.float32) * 0.1}

    def rnd(k, shape, s=0.05):
        return jax.random.normal(k, shape, jnp.float32) * s

    layers = []
    for li in range(n_layers):
        ks = jax.random.split(keys[1 + li], 12)
        layers.append({
            "wq": rnd(ks[0], (D, D)), "bq": rnd(ks[6], (1, D), 0.02),
            "wk": rnd(ks[1], (D, D)), "bk": rnd(ks[7], (1, D), 0.02),
            "wv": rnd(ks[2], (D, D)), "bv": rnd(ks[8], (1, D), 0.02),
            "wo": rnd(ks[3], (D, D)), "bo": rnd(ks[9], (1, D), 0.02),
            "w1": rnd(ks[4], (D, F)), "b1": rnd(ks[10], (1, F), 0.02),
            "w2": rnd(ks[5], (F, D)), "b2": rnd(ks[11], (1, D), 0.02),
            "ln1g": jnp.ones((1, D), jnp.float32),
            "ln1b": jnp.zeros((1, D), jnp.float32),
            "ln2g": jnp.ones((1, D), jnp.float32),
            "ln2b": jnp.zeros((1, D), jnp.float32),
        })
    params["layers"] = layers
    return params


def pack_params(params):
    """Repack raw per-layer params into the kernel layout: weights stacked
    over layers; QKV fused into one (D, 3D) matrix per layer; biases / LN
    vectors packed into small blocks (bqkv (1,3D) and bvec (6,D))."""
    wqkv, bqkv, wo, w1, b1, w2, bvec = [], [], [], [], [], [], []
    for lp in params["layers"]:
        wqkv.append(jnp.concatenate([lp["wq"], lp["wk"], lp["wv"]], axis=1))
        bqkv.append(jnp.concatenate([lp["bq"], lp["bk"], lp["bv"]], axis=1))
        wo.append(lp["wo"])
        w1.append(lp["w1"])
        b1.append(lp["b1"])
        w2.append(lp["w2"])
        bvec.append(jnp.concatenate(
            [lp["bo"], lp["b2"], lp["ln1g"], lp["ln1b"],
             lp["ln2g"], lp["ln2b"]], axis=0))                    # (6, D)

    return {
        "emb":  params["embedding"].astype(jnp.float32),          # (V, D)
        "wqkv": jnp.stack(wqkv).astype(jnp.bfloat16),             # (L, D, 3D)
        "bqkv": jnp.stack(bqkv).astype(jnp.float32),              # (L, 1, 3D)
        "wo":   jnp.stack(wo).astype(jnp.bfloat16),               # (L, D, D)
        "w1":   jnp.stack(w1).astype(jnp.bfloat16),               # (L, D, F)
        "b1":   jnp.stack(b1).astype(jnp.float32),                # (L, 1, F)
        "w2":   jnp.stack(w2).astype(jnp.bfloat16),               # (L, F, D)
        "bvec": jnp.stack(bvec).astype(jnp.float32),              # (L, 6, D)
    }


# ---------------------------------------------------------------------------
# Pure-JAX reference (f32) for a loose numerical sanity check.
# ---------------------------------------------------------------------------
def reference_forward(input_ids, params, num_heads):
    x = params["embedding"][input_ids[:, 0]]                      # (S, D)
    H = num_heads
    for lp in params["layers"]:
        D = x.shape[-1]
        dh = D // H
        q = x @ lp["wq"] + lp["bq"]
        k = x @ lp["wk"] + lp["bk"]
        v = x @ lp["wv"] + lp["bv"]
        outs = []
        for h in range(H):
            lo, hi = h * dh, (h + 1) * dh
            s = (q[:, lo:hi] @ k[:, lo:hi].T) / (dh ** 0.5)
            p = jax.nn.softmax(s, axis=-1)
            outs.append(p @ v[:, lo:hi])
        attn = jnp.concatenate(outs, axis=-1) @ lp["wo"] + lp["bo"]
        y = x + attn
        mu = y.mean(-1, keepdims=True)
        y = (y - mu) / jnp.sqrt(((y - mu) ** 2).mean(-1, keepdims=True) + 1e-5)
        y = y * lp["ln1g"] + lp["ln1b"]
        h1 = jnp.maximum(y @ lp["w1"] + lp["b1"], 0.0)
        z = y + h1 @ lp["w2"] + lp["b2"]
        mu2 = z.mean(-1, keepdims=True)
        z = (z - mu2) / jnp.sqrt(((z - mu2) ** 2).mean(-1, keepdims=True) + 1e-5)
        x = z * lp["ln2g"] + lp["ln2b"]
    return x


if __name__ == "__main__":
    # Small, module-consistent shapes.
    input_size = 20      # vocab
    hidden_size1 = 32    # embedding / model dim D
    hidden_size2 = 64    # FFN dim
    num_heads = 4
    n_layers = 2
    seq_len = 8

    key = jax.random.PRNGKey(0)
    k_ids, k_par = jax.random.split(key)
    input_ids = jax.random.randint(k_ids, (seq_len, 1), 0, input_size,
                                   dtype=jnp.int32)
    hidden0 = jnp.zeros((1, 1, hidden_size1), jnp.float32)  # unused, API parity
    raw_params = init_params(k_par, input_size, hidden_size1, hidden_size2,
                             n_layers)
    packed = pack_params(raw_params)

    out = encoder_tf_forward(input_ids, hidden0, packed, num_heads)
    out = jax.block_until_ready(out)

    assert out.shape == (seq_len, hidden_size1)
    assert bool(jnp.all(jnp.isfinite(out)))

    # Loose check vs. f32 reference (kernel matmuls run in bf16 + approx recip).
    ref = reference_forward(input_ids, raw_params, num_heads)
    max_err = float(jnp.max(jnp.abs(out - ref)))
    assert max_err < 0.15, f"kernel/reference mismatch: max abs err {max_err}"

    print("KERNEL_OK")
</pallas_src>

<mosaic_0001>
module attributes {stable_mosaic.version = 11 : i64} {
  func.func @encoder_tf_kernel(%arg0: i32, %arg1: memref<8x32xf32, #tpu.memory_space<vmem>>, %arg2: memref<1x32x96xbf16, #tpu.memory_space<vmem>>, %arg3: memref<1x1x96xf32, #tpu.memory_space<vmem>>, %arg4: memref<1x32x32xbf16, #tpu.memory_space<vmem>>, %arg5: memref<1x32x64xbf16, #tpu.memory_space<vmem>>, %arg6: memref<1x1x64xf32, #tpu.memory_space<vmem>>, %arg7: memref<1x64x32xbf16, #tpu.memory_space<vmem>>, %arg8: memref<1x6x32xf32, #tpu.memory_space<vmem>>, %arg9: memref<8x32xf32, #tpu.memory_space<vmem>>) attributes {dimension_semantics = [#tpu.dimension_semantics<arbitrary>], iteration_bounds = array<i64: 2>, scalar_prefetch = 0 : i64, scratch_operands = 0 : i64, tpu.core_type = #tpu.core_type<tc>, window_params = [{pipeline_mode = #tpu.pipeline_mode<synchronous>, transform_indices = @transform_0, window_bounds = array<i64: 8, 32>}, {transform_indices = @transform_1, window_bounds = array<i64: 1, 32, 96>}, {transform_indices = @transform_2, window_bounds = array<i64: 1, 1, 96>}, {transform_indices = @transform_3, window_bounds = array<i64: 1, 32, 32>}, {transform_indices = @transform_4, window_bounds = array<i64: 1, 32, 64>}, {transform_indices = @transform_5, window_bounds = array<i64: 1, 1, 64>}, {transform_indices = @transform_6, window_bounds = array<i64: 1, 64, 32>}, {transform_indices = @transform_7, window_bounds = array<i64: 1, 6, 32>}, {pipeline_mode = #tpu.pipeline_mode<synchronous>, transform_indices = @transform_8, window_bounds = array<i64: 8, 32>}]} {
    %c0_i32 = arith.constant 0 : i32
    %0 = arith.cmpi eq, %arg0, %c0_i32 : i32
    %1 = arith.extui %0 : i1 to i32
    %c0_i32_0 = arith.constant 0 : i32
    %2 = arith.cmpi ne, %1, %c0_i32_0 : i32
    scf.if %2 {
      %c0_44 = arith.constant 0 : index
      %c0_45 = arith.constant 0 : index
      %142 = vector.load %arg1[%c0_44, %c0_45] : memref<8x32xf32, #tpu.memory_space<vmem>>, vector<8x32xf32>
      %c0_46 = arith.constant 0 : index
      %c0_47 = arith.constant 0 : index
      %143 = vector.load %arg9[%c0_46, %c0_47] : memref<8x32xf32, #tpu.memory_space<vmem>>, vector<8x32xf32>
      tpu.vector_store %arg9[%c0_46, %c0_47], %142 {strides = array<i32>} : memref<8x32xf32, #tpu.memory_space<vmem>>, vector<8x32xf32>,
    } else {
    }
    %c0 = arith.constant 0 : index
    %c0_1 = arith.constant 0 : index
    %3 = vector.load %arg9[%c0, %c0_1] : memref<8x32xf32, #tpu.memory_space<vmem>>, vector<8x32xf32>
    %4 = arith.truncf %3 : vector<8x32xf32> to vector<8x32xbf16>
    %c0_2 = arith.constant 0 : index
    %c0_3 = arith.constant 0 : index
    %c0_4 = arith.constant 0 : index
    %5 = vector.load %arg2[%c0_2, %c0_3, %c0_4] : memref<1x32x96xbf16, #tpu.memory_space<vmem>>, vector<1x32x96xbf16>
    %6 = vector.shape_cast %5 : vector<1x32x96xbf16> to vector<32x96xbf16>
    %cst = arith.constant dense<0.000000e+00> : vector<8x96xf32>
    %7 = tpu.matmul %4, %6, %cst {dimension_numbers = #tpu.dot_dimension_numbers<[1], [0], [0], [1], [0, 0, 1, 1], [], []>} : vector<8x32xbf16>, vector<32x96xbf16>, vector<8x96xf32> -> vector<8x96xf32>
    %c0_5 = arith.constant 0 : index
    %c0_6 = arith.constant 0 : index
    %c0_7 = arith.constant 0 : index
    %8 = vector.load %arg3[%c0_5, %c0_6, %c0_7] : memref<1x1x96xf32, #tpu.memory_space<vmem>>, vector<1x1x96xf32>
    %9 = vector.shape_cast %8 : vector<1x1x96xf32> to vector<1x96xf32>
    %10 = vector.broadcast %9 : vector<1x96xf32> to vector<8x96xf32>
    %11 = arith.addf %7, %10 : vector<8x96xf32>
    %12 = vector.extract_strided_slice %11 {offsets = [0, 0], sizes = [8, 32], strides = [1, 1]} : vector<8x96xf32> to vector<8x32xf32>
    %cst_8 = arith.constant 0.353553385 : f32
    %13 = vector.broadcast %cst_8 : f32 to vector<8x32xf32>
    %14 = arith.mulf %12, %13 : vector<8x32xf32>
    %15 = vector.extract_strided_slice %11 {offsets = [0, 32], sizes = [8, 32], strides = [1, 1]} : vector<8x96xf32> to vector<8x32xf32>
    %16 = vector.extract_strided_slice %11 {offsets = [0, 64], sizes = [8, 32], strides = [1, 1]} : vector<8x96xf32> to vector<8x32xf32>
    %17 = vector.extract_strided_slice %14 {offsets = [0, 0], sizes = [8, 8], strides = [1, 1]} : vector<8x32xf32> to vector<8x8xf32>
    %18 = vector.extract_strided_slice %14 {offsets = [0, 8], sizes = [8, 8], strides = [1, 1]} : vector<8x32xf32> to vector<8x8xf32>
    %19 = vector.extract_strided_slice %14 {offsets = [0, 16], sizes = [8, 8], strides = [1, 1]} : vector<8x32xf32> to vector<8x8xf32>
    %20 = vector.extract_strided_slice %14 {offsets = [0, 24], sizes = [8, 8], strides = [1, 1]} : vector<8x32xf32> to vector<8x8xf32>
    %21 = vector.shape_cast %17 : vector<8x8xf32> to vector<1x8x8xf32>
    %22 = vector.shape_cast %18 : vector<8x8xf32> to vector<1x8x8xf32>
    %23 = vector.shape_cast %19 : vector<8x8xf32> to vector<1x8x8xf32>
    %24 = vector.shape_cast %20 : vector<8x8xf32> to vector<1x8x8xf32>
    %25 = tpu.concatenate %21, %22, %23, %24 in 0 : vector<1x8x8xf32>, vector<1x8x8xf32>, vector<1x8x8xf32>, vector<1x8x8xf32> -> vector<4x8x8xf32>
    %26 = arith.truncf %25 : vector<4x8x8xf32> to vector<4x8x8xbf16>
    %27 = vector.extract_strided_slice %15 {offsets = [0, 0], sizes = [8, 8], strides = [1, 1]} : vector<8x32xf32> to vector<8x8xf32>
    %28 = vector.extract_strided_slice %15 {offsets = [0, 8], sizes = [8, 8], strides = [1, 1]} : vector<8x32xf32> to vector<8x8xf32>
    %29 = vector.extract_strided_slice %15 {offsets = [0, 16], sizes = [8, 8], strides = [1, 1]} : vector<8x32xf32> to vector<8x8xf32>
    %30 = vector.extract_strided_slice %15 {offsets = [0, 24], sizes = [8, 8], strides = [1, 1]} : vector<8x32xf32> to vector<8x8xf32>
    %31 = vector.shape_cast %27 : vector<8x8xf32> to vector<1x8x8xf32>
    %32 = vector.shape_cast %28 : vector<8x8xf32> to vector<1x8x8xf32>
    %33 = vector.shape_cast %29 : vector<8x8xf32> to vector<1x8x8xf32>
    %34 = vector.shape_cast %30 : vector<8x8xf32> to vector<1x8x8xf32>
    %35 = tpu.concatenate %31, %32, %33, %34 in 0 : vector<1x8x8xf32>, vector<1x8x8xf32>, vector<1x8x8xf32>, vector<1x8x8xf32> -> vector<4x8x8xf32>
    %36 = arith.truncf %35 : vector<4x8x8xf32> to vector<4x8x8xbf16>
    %37 = vector.extract_strided_slice %16 {offsets = [0, 0], sizes = [8, 8], strides = [1, 1]} : vector<8x32xf32> to vector<8x8xf32>
    %38 = vector.extract_strided_slice %16 {offsets = [0, 8], sizes = [8, 8], strides = [1, 1]} : vector<8x32xf32> to vector<8x8xf32>
    %39 = vector.extract_strided_slice %16 {offsets = [0, 16], sizes = [8, 8], strides = [1, 1]} : vector<8x32xf32> to vector<8x8xf32>
    %40 = vector.extract_strided_slice %16 {offsets = [0, 24], sizes = [8, 8], strides = [1, 1]} : vector<8x32xf32> to vector<8x8xf32>
    %41 = vector.shape_cast %37 : vector<8x8xf32> to vector<1x8x8xf32>
    %42 = vector.shape_cast %38 : vector<8x8xf32> to vector<1x8x8xf32>
    %43 = vector.shape_cast %39 : vector<8x8xf32> to vector<1x8x8xf32>
    %44 = vector.shape_cast %40 : vector<8x8xf32> to vector<1x8x8xf32>
    %45 = tpu.concatenate %41, %42, %43, %44 in 0 : vector<1x8x8xf32>, vector<1x8x8xf32>, vector<1x8x8xf32>, vector<1x8x8xf32> -> vector<4x8x8xf32>
    %46 = arith.truncf %45 : vector<4x8x8xf32> to vector<4x8x8xbf16>
    "tpu.trace_start"() <{level = 10 : i32, message = "hqd,hkd->hqk"}> : () -> ()
    %cst_9 = arith.constant dense<0.000000e+00> : vector<4x8x8xf32>
    %47 = tpu.matmul %26, %36, %cst_9 {dimension_numbers = #tpu.dot_dimension_numbers<[2], [2], [1], [1], [0, 0, 0, 1, 1, 1], [0], [0]>} : vector<4x8x8xbf16>, vector<4x8x8xbf16>, vector<4x8x8xf32> -> vector<4x8x8xf32>
    "tpu.trace_stop"() : () -> ()
    %cst_10 = arith.constant dense<0xFF800000> : vector<4x8xf32>
    %48 = vector.multi_reduction <maximumf>, %47, %cst_10 [2] : vector<4x8x8xf32> to vector<4x8xf32>
    %49 = vector.shape_cast %48 : vector<4x8xf32> to vector<4x8x1xf32>
    %50 = vector.broadcast %49 : vector<4x8x1xf32> to vector<4x8x8xf32>
    %51 = arith.subf %47, %50 : vector<4x8x8xf32>
    %52 = math.exp %51 : vector<4x8x8xf32>
    %cst_11 = arith.constant dense<0.000000e+00> : vector<4x8xf32>
    %53 = vector.multi_reduction <add>, %52, %cst_11 [2] : vector<4x8x8xf32> to vector<4x8xf32>
    %54 = vector.shape_cast %53 : vector<4x8xf32> to vector<4x8x1xf32>
    %55 = tpu.reciprocal %54 {approx = true} : vector<4x8x1xf32> -> vector<4x8x1xf32>
    %56 = vector.broadcast %55 : vector<4x8x1xf32> to vector<4x8x8xf32>
    %57 = arith.mulf %52, %56 : vector<4x8x8xf32>
    %58 = arith.truncf %57 : vector<4x8x8xf32> to vector<4x8x8xbf16>
    "tpu.trace_start"() <{level = 10 : i32, message = "hqk,hkd->hqd"}> : () -> ()
    %cst_12 = arith.constant dense<0.000000e+00> : vector<4x8x8xf32>
    %59 = tpu.matmul %58, %46, %cst_12 {dimension_numbers = #tpu.dot_dimension_numbers<[2], [1], [1], [2], [0, 0, 0, 1, 1, 2], [0], [0]>} : vector<4x8x8xbf16>, vector<4x8x8xbf16>, vector<4x8x8xf32> -> vector<4x8x8xf32>
    "tpu.trace_stop"() : () -> ()
    %60 = vector.extract_strided_slice %59 {offsets = [0, 0, 0], sizes = [1, 8, 8], strides = [1, 1, 1]} : vector<4x8x8xf32> to vector<1x8x8xf32>
    %61 = vector.shape_cast %60 : vector<1x8x8xf32> to vector<8x8xf32>
    %62 = vector.extract_strided_slice %59 {offsets = [1, 0, 0], sizes = [1, 8, 8], strides = [1, 1, 1]} : vector<4x8x8xf32> to vector<1x8x8xf32>
    %63 = vector.shape_cast %62 : vector<1x8x8xf32> to vector<8x8xf32>
    %64 = vector.extract_strided_slice %59 {offsets = [2, 0, 0], sizes = [1, 8, 8], strides = [1, 1, 1]} : vector<4x8x8xf32> to vector<1x8x8xf32>
    %65 = vector.shape_cast %64 : vector<1x8x8xf32> to vector<8x8xf32>
    %66 = vector.extract_strided_slice %59 {offsets = [3, 0, 0], sizes = [1, 8, 8], strides = [1, 1, 1]} : vector<4x8x8xf32> to vector<1x8x8xf32>
    %67 = vector.shape_cast %66 : vector<1x8x8xf32> to vector<8x8xf32>
    %68 = tpu.concatenate %61, %63, %65, %67 in 1 : vector<8x8xf32>, vector<8x8xf32>, vector<8x8xf32>, vector<8x8xf32> -> vector<8x32xf32>
    %c0_13 = arith.constant 0 : index
    %c0_14 = arith.constant 0 : index
    %c0_15 = arith.constant 0 : index
    %69 = vector.load %arg8[%c0_13, %c0_14, %c0_15] : memref<1x6x32xf32, #tpu.memory_space<vmem>>, vector<1x6x32xf32>
    %70 = vector.shape_cast %69 : vector<1x6x32xf32> to vector<6x32xf32>
    %71 = arith.truncf %68 : vector<8x32xf32> to vector<8x32xbf16>
    %c0_16 = arith.constant 0 : index
    %c0_17 = arith.constant 0 : index
    %c0_18 = arith.constant 0 : index
    %72 = vector.load %arg4[%c0_16, %c0_17, %c0_18] : memref<1x32x32xbf16, #tpu.memory_space<vmem>>, vector<1x32x32xbf16>
    %73 = vector.shape_cast %72 : vector<1x32x32xbf16> to vector<32x32xbf16>
    %cst_19 = arith.constant dense<0.000000e+00> : vector<8x32xf32>
    %74 = tpu.matmul %71, %73, %cst_19 {dimension_numbers = #tpu.dot_dimension_numbers<[1], [0], [0], [1], [0, 0, 1, 1], [], []>} : vector<8x32xbf16>, vector<32x32xbf16>, vector<8x32xf32> -> vector<8x32xf32>
    %75 = vector.extract_strided_slice %70 {offsets = [0, 0], sizes = [1, 32], strides = [1, 1]} : vector<6x32xf32> to vector<1x32xf32>
    %76 = vector.broadcast %75 : vector<1x32xf32> to vector<8x32xf32>
    %77 = arith.addf %74, %76 : vector<8x32xf32>
    %78 = arith.addf %3, %77 : vector<8x32xf32>
    %cst_20 = arith.constant dense<0.000000e+00> : vector<8xf32>
    %79 = vector.multi_reduction <add>, %78, %cst_20 [1] : vector<8x32xf32> to vector<8xf32>
    %80 = vector.shape_cast %79 : vector<8xf32> to vector<8x1xf32>
    %cst_21 = arith.constant 3.200000e+01 : f32
    %81 = vector.broadcast %cst_21 : f32 to vector<8x1xf32>
    %82 = arith.divf %80, %81 : vector<8x1xf32>
    %83 = vector.broadcast %82 : vector<8x1xf32> to vector<8x32xf32>
    %84 = arith.subf %78, %83 : vector<8x32xf32>
    %85 = arith.mulf %84, %84 : vector<8x32xf32>
    %cst_22 = arith.constant dense<0.000000e+00> : vector<8xf32>
    %86 = vector.multi_reduction <add>, %85, %cst_22 [1] : vector<8x32xf32> to vector<8xf32>
    %87 = vector.shape_cast %86 : vector<8xf32> to vector<8x1xf32>
    %cst_23 = arith.constant 3.200000e+01 : f32
    %88 = vector.broadcast %cst_23 : f32 to vector<8x1xf32>
    %89 = arith.divf %87, %88 : vector<8x1xf32>
    %cst_24 = arith.constant 9.99999974E-6 : f32
    %90 = vector.broadcast %cst_24 : f32 to vector<8x1xf32>
    %91 = arith.addf %89, %90 : vector<8x1xf32>
    %92 = math.rsqrt %91 : vector<8x1xf32>
    %93 = vector.broadcast %92 : vector<8x1xf32> to vector<8x32xf32>
    %94 = arith.mulf %84, %93 : vector<8x32xf32>
    %95 = vector.extract_strided_slice %70 {offsets = [2, 0], sizes = [1, 32], strides = [1, 1]} : vector<6x32xf32> to vector<1x32xf32>
    %96 = vector.broadcast %95 : vector<1x32xf32> to vector<8x32xf32>
    %97 = arith.mulf %94, %96 : vector<8x32xf32>
    %98 = vector.extract_strided_slice %70 {offsets = [3, 0], sizes = [1, 32], strides = [1, 1]} : vector<6x32xf32> to vector<1x32xf32>
    %99 = vector.broadcast %98 : vector<1x32xf32> to vector<8x32xf32>
    %100 = arith.addf %97, %99 : vector<8x32xf32>
    %101 = arith.truncf %100 : vector<8x32xf32> to vector<8x32xbf16>
    %c0_25 = arith.constant 0 : index
    %c0_26 = arith.constant 0 : index
    %c0_27 = arith.constant 0 : index
    %102 = vector.load %arg5[%c0_25, %c0_26, %c0_27] : memref<1x32x64xbf16, #tpu.memory_space<vmem>>, vector<1x32x64xbf16>
    %103 = vector.shape_cast %102 : vector<1x32x64xbf16> to vector<32x64xbf16>
    %cst_28 = arith.constant dense<0.000000e+00> : vector<8x64xf32>
    %104 = tpu.matmul %101, %103, %cst_28 {dimension_numbers = #tpu.dot_dimension_numbers<[1], [0], [0], [1], [0, 0, 1, 1], [], []>} : vector<8x32xbf16>, vector<32x64xbf16>, vector<8x64xf32> -> vector<8x64xf32>
    %c0_29 = arith.constant 0 : index
    %c0_30 = arith.constant 0 : index
    %c0_31 = arith.constant 0 : index
    %105 = vector.load %arg6[%c0_29, %c0_30, %c0_31] : memref<1x1x64xf32, #tpu.memory_space<vmem>>, vector<1x1x64xf32>
    %106 = vector.shape_cast %105 : vector<1x1x64xf32> to vector<1x64xf32>
    %107 = vector.broadcast %106 : vector<1x64xf32> to vector<8x64xf32>
    %108 = arith.addf %104, %107 : vector<8x64xf32>
    %cst_32 = arith.constant 0.000000e+00 : f32
    %109 = vector.broadcast %cst_32 : f32 to vector<8x64xf32>
    %110 = arith.maximumf %108, %109 : vector<8x64xf32>
    %111 = arith.truncf %110 : vector<8x64xf32> to vector<8x64xbf16>
    %c0_33 = arith.constant 0 : index
    %c0_34 = arith.constant 0 : index
    %c0_35 = arith.constant 0 : index
    %112 = vector.load %arg7[%c0_33, %c0_34, %c0_35] : memref<1x64x32xbf16, #tpu.memory_space<vmem>>, vector<1x64x32xbf16>
    %113 = vector.shape_cast %112 : vector<1x64x32xbf16> to vector<64x32xbf16>
    %cst_36 = arith.constant dense<0.000000e+00> : vector<8x32xf32>
    %114 = tpu.matmul %111, %113, %cst_36 {dimension_numbers = #tpu.dot_dimension_numbers<[1], [0], [0], [1], [0, 0, 1, 1], [], []>} : vector<8x64xbf16>, vector<64x32xbf16>, vector<8x32xf32> -> vector<8x32xf32>
    %115 = vector.extract_strided_slice %70 {offsets = [1, 0], sizes = [1, 32], strides = [1, 1]} : vector<6x32xf32> to vector<1x32xf32>
    %116 = vector.broadcast %115 : vector<1x32xf32> to vector<8x32xf32>
    %117 = arith.addf %114, %116 : vector<8x32xf32>
    %118 = arith.addf %100, %117 : vector<8x32xf32>
    %cst_37 = arith.constant dense<0.000000e+00> : vector<8xf32>
    %119 = vector.multi_reduction <add>, %118, %cst_37 [1] : vector<8x32xf32> to vector<8xf32>
    %120 = vector.shape_cast %119 : vector<8xf32> to vector<8x1xf32>
    %cst_38 = arith.constant 3.200000e+01 : f32
    %121 = vector.broadcast %cst_38 : f32 to vector<8x1xf32>
    %122 = arith.divf %120, %121 : vector<8x1xf32>
    %123 = vector.broadcast %122 : vector<8x1xf32> to vector<8x32xf32>
    %124 = arith.subf %118, %123 : vector<8x32xf32>
    %125 = arith.mulf %124, %124 : vector<8x32xf32>
    %cst_39 = arith.constant dense<0.000000e+00> : vector<8xf32>
    %126 = vector.multi_reduction <add>, %125, %cst_39 [1] : vector<8x32xf32> to vector<8xf32>
    %127 = vector.shape_cast %126 : vector<8xf32> to vector<8x1xf32>
    %cst_40 = arith.constant 3.200000e+01 : f32
    %128 = vector.broadcast %cst_40 : f32 to vector<8x1xf32>
    %129 = arith.divf %127, %128 : vector<8x1xf32>
    %cst_41 = arith.constant 9.99999974E-6 : f32
    %130 = vector.broadcast %cst_41 : f32 to vector<8x1xf32>
    %131 = arith.addf %129, %130 : vector<8x1xf32>
    %132 = math.rsqrt %131 : vector<8x1xf32>
    %133 = vector.broadcast %132 : vector<8x1xf32> to vector<8x32xf32>
    %134 = arith.mulf %124, %133 : vector<8x32xf32>
    %135 = vector.extract_strided_slice %70 {offsets = [4, 0], sizes = [1, 32], strides = [1, 1]} : vector<6x32xf32> to vector<1x32xf32>
    %136 = vector.broadcast %135 : vector<1x32xf32> to vector<8x32xf32>
    %137 = arith.mulf %134, %136 : vector<8x32xf32>
    %138 = vector.extract_strided_slice %70 {offsets = [5, 0], sizes = [1, 32], strides = [1, 1]} : vector<6x32xf32> to vector<1x32xf32>
    %139 = vector.broadcast %138 : vector<1x32xf32> to vector<8x32xf32>
    %140 = arith.addf %137, %139 : vector<8x32xf32>
    %c0_42 = arith.constant 0 : index
    %c0_43 = arith.constant 0 : index
    %141 = vector.load %arg9[%c0_42, %c0_43] : memref<8x32xf32, #tpu.memory_space<vmem>>, vector<8x32xf32>
    tpu.vector_store %arg9[%c0_42, %c0_43], %140 {strides = array<i32>} : memref<8x32xf32, #tpu.memory_space<vmem>>, vector<8x32xf32>,
    return
  }
  func.func @transform_0(%arg0: i32) -> (i32, i32) {
    %c0_i32 = arith.constant 0 : i32
    %c0_i32_0 = arith.constant 0 : i32
    %c0_i32_1 = arith.constant 0 : i32
    return %c0_i32, %c0_i32_0 : i32, i32
  }
  func.func @transform_1(%arg0: i32) -> (i32, i32, i32) {
    %c0_i32 = arith.constant 0 : i32
    %c0_i32_0 = arith.constant 0 : i32
    %c0_i32_1 = arith.constant 0 : i32
    return %arg0, %c0_i32, %c0_i32_0 : i32, i32, i32
  }
  func.func @transform_2(%arg0: i32) -> (i32, i32, i32) {
    %c0_i32 = arith.constant 0 : i32
    %c0_i32_0 = arith.constant 0 : i32
    %c0_i32_1 = arith.constant 0 : i32
    return %arg0, %c0_i32, %c0_i32_0 : i32, i32, i32
  }
  func.func @transform_3(%arg0: i32) -> (i32, i32, i32) {
    %c0_i32 = arith.constant 0 : i32
    %c0_i32_0 = arith.constant 0 : i32
    %c0_i32_1 = arith.constant 0 : i32
    return %arg0, %c0_i32, %c0_i32_0 : i32, i32, i32
  }
  func.func @transform_4(%arg0: i32) -> (i32, i32, i32) {
    %c0_i32 = arith.constant 0 : i32
    %c0_i32_0 = arith.constant 0 : i32
    %c0_i32_1 = arith.constant 0 : i32
    return %arg0, %c0_i32, %c0_i32_0 : i32, i32, i32
  }
  func.func @transform_5(%arg0: i32) -> (i32, i32, i32) {
    %c0_i32 = arith.constant 0 : i32
    %c0_i32_0 = arith.constant 0 : i32
    %c0_i32_1 = arith.constant 0 : i32
    return %arg0, %c0_i32, %c0_i32_0 : i32, i32, i32
  }
  func.func @transform_6(%arg0: i32) -> (i32, i32, i32) {
    %c0_i32 = arith.constant 0 : i32
    %c0_i32_0 = arith.constant 0 : i32
    %c0_i32_1 = arith.constant 0 : i32
    return %arg0, %c0_i32, %c0_i32_0 : i32, i32, i32
  }
  func.func @transform_7(%arg0: i32) -> (i32, i32, i32) {
    %c0_i32 = arith.constant 0 : i32
    %c0_i32_0 = arith.constant 0 : i32
    %c0_i32_1 = arith.constant 0 : i32
    return %arg0, %c0_i32, %c0_i32_0 : i32, i32, i32
  }
  func.func @transform_8(%arg0: i32) -> (i32, i32) {
    %c0_i32 = arith.constant 0 : i32
    %c0_i32_0 = arith.constant 0 : i32
    %c0_i32_1 = arith.constant 0 : i32
    return %c0_i32, %c0_i32_0 : i32, i32
  }
}

</mosaic_0001>

<llo_original>
// kernel: tpu_custom_call.1
$region0: #{tpu_custom_call.1}
  #allocation0 [shape = 'u32[]', space=smem, size = 0x4, offset = 0x4, fixed_abs, tag = 'smem constant byte address 0x4 - core index']
  #allocation1 [shape = 'u32[144,128]{1,0:T(1,128)}', space=vmem, size = 0x12000, scoped, tag = 'internal scratch']
  %s0 = inlined_call_operand.hbm [shape: f32[8,32], index: 0, kind: input, shape index: {}]
  %s1 = inlined_call_operand.hbm [shape: bf16[2,32,96], index: 1, kind: input, shape index: {}]
  %s2 = inlined_call_operand.hbm [shape: f32[2,1,96], index: 2, kind: input, shape index: {}]
  %s3 = inlined_call_operand.hbm [shape: bf16[2,32,32], index: 3, kind: input, shape index: {}]
  %s4 = inlined_call_operand.hbm [shape: bf16[2,32,64], index: 4, kind: input, shape index: {}]
  %s5 = inlined_call_operand.hbm [shape: f32[2,1,64], index: 5, kind: input, shape index: {}]
  %s6 = inlined_call_operand.hbm [shape: bf16[2,64,32], index: 6, kind: input, shape index: {}]
  %s7 = inlined_call_operand.hbm [shape: f32[2,6,32], index: 7, kind: input, shape index: {}]
  %s8 = inlined_call_operand.hbm [shape: f32[8,32], index: 8, kind: output, shape index: {}]
  %s9 = sld [smem:[#allocation0]]
  $region101: #{tpu_custom_call.1} parent=0
    _
  %s11 = ssub.s32 1, %s9
  %s12 = scalar_select 0, %s11, %s9
  $region1: #{tpu_custom_call.1} parent=0
    #allocation2 [shape = 'u8[4096]{0}', space=vmem, size = 0x1000, scoped, tag = 'input window, operand 0, single buffered']
    #allocation3 [shape = 's32[2]{0}', space=sflag, size = 0x8, scoped, tag = 'scoped memory for tpu_custom_call.1']
    #allocation4 [shape = 's32[2]{0}', space=sflag, size = 0x8, scoped, tag = 'scoped memory for tpu_custom_call.1']
    #allocation5 [shape = 'u8[16384]{0}', space=vmem, size = 0x4000, scoped, tag = 'input window, operand 1']
    #allocation6 [shape = 's32[2]{0}', space=sflag, size = 0x8, scoped, tag = 'scoped memory for tpu_custom_call.1']
    #allocation7 [shape = 'u8[1024]{0}', space=vmem, size = 0x400, scoped, tag = 'input window, operand 2']
    #allocation8 [shape = 'u8[16384]{0}', space=vmem, size = 0x4000, scoped, tag = 'input window, operand 3']
    #allocation9 [shape = 's32[2]{0}', space=sflag, size = 0x8, scoped, tag = 'scoped memory for tpu_custom_call.1']
    #allocation10 [shape = 'u8[16384]{0}', space=vmem, size = 0x4000, scoped, tag = 'input window, operand 4']
    #allocation11 [shape = 'u8[1024]{0}', space=vmem, size = 0x400, scoped, tag = 'input window, operand 5']
    #allocation12 [shape = 's32[2]{0}', space=sflag, size = 0x8, scoped, tag = 'scoped memory for tpu_custom_call.1']
    #allocation13 [shape = 'u8[32768]{0}', space=vmem, size = 0x8000, scoped, tag = 'input window, operand 6']
    #allocation14 [shape = 'u8[8192]{0}', space=vmem, size = 0x2000, scoped, tag = 'input window, operand 7']
    #allocation15 [shape = 's32[2]{0}', space=sflag, size = 0x8, scoped, tag = 'scoped memory for tpu_custom_call.1']
    #allocation16 [shape = 'u8[4096]{0}', space=vmem, size = 0x1000, scoped, tag = 'output window, operand 0, single buffered']
    %13 = vsyncpa [#allocation3], 0
    %14 = vsyncpa [#allocation6], 0
    %s15 = scalar_lea.sflag [#allocation6], 1
    %16 = vsyncpa %s15, 0
    %17 = vsyncpa [#allocation9], 0
    %s18 = scalar_lea.sflag [#allocation9], 1
    %19 = vsyncpa %s18, 0
    %20 = vsyncpa [#allocation12], 0
    %s21 = scalar_lea.sflag [#allocation12], 1
    %22 = vsyncpa %s21, 0
    %23 = vsyncpa [#allocation15], 0
    %s24 = scalar_lea.sflag [#allocation15], 1
    %25 = vsyncpa %s24, 0
    %26 = vsyncpa [#allocation4], 0
    loop: start=0, step=1, limit=4
    $region2: #{tpu_custom_call.1} parent=1 // loop_pre_header
      _
    $region3: #{tpu_custom_call.1} parent=1 // loop_header
      %s28 = sphi 0, %s32
      %p29 = scmp.ge.s32.totalorder %s28, 4
      %s36 = sphi 0, %s36
      %s38 = sphi 0, %s36
      %s39 = sphi 0, %s38
      %s53 = sphi 0, %s39
      %s59 = sphi 0, %s61
      %s62 = sphi 0, %s59
      %s63 = sphi 0, %s62
      %s79 = sphi 0, %s63
      %s85 = sphi 0, %s87
      %s88 = sphi 0, %s85
      %s89 = sphi 0, %s88
      %s105 = sphi 0, %s89
      %s111 = sphi 0, %s113
      %s114 = sphi 0, %s111
      %s115 = sphi 0, %s114
      %s131 = sphi 0, %s115
      %s137 = sphi 0, %s139
      %s140 = sphi 0, %s137
      %s141 = sphi 0, %s140
      %s157 = sphi 0, %s141
      %s163 = sphi 0, %s165
      %s166 = sphi 0, %s163
      %s167 = sphi 0, %s166
      %s183 = sphi 0, %s167
      %s189 = sphi 0, %s191
      %s192 = sphi 0, %s189
      %s193 = sphi 0, %s192
      %s209 = sphi 0, %s193
      %s215 = sphi 0, %s217
      %s218 = sphi 0, %s215
      %s219 = sphi 0, %s218
      %s235 = sphi 0, %s219
      %s239 = sphi 0, %s239
      %s241 = sphi 0, %s239
      %s242 = sphi 0, %s241
      %s256 = sphi 0, %s242
    $region4: #{tpu_custom_call.1} parent=1 // loop_header_branch
      %31 = sbr.rel (%p29) target = $region8
    $region5: #{tpu_custom_call.1} parent=1 // loop_body
      %s33 = ssub.s32 %s28, 1
      %s34 = ssub.s32 %s28, 2
      %s35 = sadd.s32 %s28, 1
      %s37 = sadd.s32 %s36, 1
      %p40 = scmp.eq.s32.totalorder %s28, 1
      %p41 = scmp.ne.s32.totalorder %s36, %s38
      %p42 = scmp.eq.s32.totalorder %s28, 0
      %p43 = por %p41, %p42
      %p44 = scmp.ne.s32.totalorder %s36, %s38
      %p45 = scmp.eq.s32.totalorder %s33, 1
      %p46 = por %p44, %p45
      %p47 = scmp.ne.s32.totalorder %s38, %s39
      %p48 = scmp.eq.s32.totalorder %s33, 0
      %p49 = por %p47, %p48
      %p50 = scmp.ne.s32.totalorder %s38, %s39
      %p51 = scmp.eq.s32.totalorder %s34, 1
      %p52 = por %p50, %p51
      %p54 = scmp.ne.s32.totalorder %s39, %s53
      %p55 = scmp.eq.s32.totalorder %s34, 0
      %p56 = por %p54, %p55
      %s57 = ssub.s32 %s28, %s35
      %p58 = scmp.eq.s32.totalorder %s57, 0
      %s60 = sadd.s32 %s59, 1
      %s61 = scalar_select %p58, %s59, %s60
      %p64 = pneg %p58
      %p65 = scmp.eq.s32.totalorder %s28, 1
      %p66 = por %p64, %p65
      %p67 = scmp.ne.s32.totalorder %s59, %s62
      %p68 = scmp.eq.s32.totalorder %s28, 0
      %p69 = por %p67, %p68
      %p70 = scmp.ne.s32.totalorder %s59, %s62
      %p71 = scmp.eq.s32.totalorder %s33, 1
      %p72 = por %p70, %p71
      %p73 = scmp.ne.s32.totalorder %s62, %s63
      %p74 = scmp.eq.s32.totalorder %s33, 0
      %p75 = por %p73, %p74
      %p76 = scmp.ne.s32.totalorder %s62, %s63
      %p77 = scmp.eq.s32.totalorder %s34, 1
      %p78 = por %p76, %p77
      %p80 = scmp.ne.s32.totalorder %s63, %s79
      %p81 = scmp.eq.s32.totalorder %s34, 0
      %p82 = por %p80, %p81
      %s83 = ssub.s32 %s28, %s35
      %p84 = scmp.eq.s32.totalorder %s83, 0
      %s86 = sadd.s32 %s85, 1
      %s87 = scalar_select %p84, %s85, %s86
      %p90 = pneg %p84
      %p91 = scmp.eq.s32.totalorder %s28, 1
      %p92 = por %p90, %p91
      %p93 = scmp.ne.s32.totalorder %s85, %s88
      %p94 = scmp.eq.s32.totalorder %s28, 0
      %p95 = por %p93, %p94
      %p96 = scmp.ne.s32.totalorder %s85, %s88
      %p97 = scmp.eq.s32.totalorder %s33, 1
      %p98 = por %p96, %p97
      %p99 = scmp.ne.s32.totalorder %s88, %s89
      %p100 = scmp.eq.s32.totalorder %s33, 0
      %p101 = por %p99, %p100
      %p102 = scmp.ne.s32.totalorder %s88, %s89
      %p103 = scmp.eq.s32.totalorder %s34, 1
      %p104 = por %p102, %p103
      %p106 = scmp.ne.s32.totalorder %s89, %s105
      %p107 = scmp.eq.s32.totalorder %s34, 0
      %p108 = por %p106, %p107
      %s109 = ssub.s32 %s28, %s35
      %p110 = scmp.eq.s32.totalorder %s109, 0
      %s112 = sadd.s32 %s111, 1
      %s113 = scalar_select %p110, %s111, %s112
      %p116 = pneg %p110
      %p117 = scmp.eq.s32.totalorder %s28, 1
      %p118 = por %p116, %p117
      %p119 = scmp.ne.s32.totalorder %s111, %s114
      %p120 = scmp.eq.s32.totalorder %s28, 0
      %p121 = por %p119, %p120
      %p122 = scmp.ne.s32.totalorder %s111, %s114
      %p123 = scmp.eq.s32.totalorder %s33, 1
      %p124 = por %p122, %p123
      %p125 = scmp.ne.s32.totalorder %s114, %s115
      %p126 = scmp.eq.s32.totalorder %s33, 0
      %p127 = por %p125, %p126
      %p128 = scmp.ne.s32.totalorder %s114, %s115
      %p129 = scmp.eq.s32.totalorder %s34, 1
      %p130 = por %p128, %p129
      %p132 = scmp.ne.s32.totalorder %s115, %s131
      %p133 = scmp.eq.s32.totalorder %s34, 0
      %p134 = por %p132, %p133
      %s135 = ssub.s32 %s28, %s35
      %p136 = scmp.eq.s32.totalorder %s135, 0
      %s138 = sadd.s32 %s137, 1
      %s139 = scalar_select %p136, %s137, %s138
      %p142 = pneg %p136
      %p143 = scmp.eq.s32.totalorder %s28, 1
      %p144 = por %p142, %p143
      %p145 = scmp.ne.s32.totalorder %s137, %s140
      %p146 = scmp.eq.s32.totalorder %s28, 0
      %p147 = por %p145, %p146
      %p148 = scmp.ne.s32.totalorder %s137, %s140
      %p149 = scmp.eq.s32.totalorder %s33, 1
      %p150 = por %p148, %p149
      %p151 = scmp.ne.s32.totalorder %s140, %s141
      %p152 = scmp.eq.s32.totalorder %s33, 0
      %p153 = por %p151, %p152
      %p154 = scmp.ne.s32.totalorder %s140, %s141
      %p155 = scmp.eq.s32.totalorder %s34, 1
      %p156 = por %p154, %p155
      %p158 = scmp.ne.s32.totalorder %s141, %s157
      %p159 = scmp.eq.s32.totalorder %s34, 0
      %p160 = por %p158, %p159
      %s161 = ssub.s32 %s28, %s35
      %p162 = scmp.eq.s32.totalorder %s161, 0
      %s164 = sadd.s32 %s163, 1
      %s165 = scalar_select %p162, %s163, %s164
      %p168 = pneg %p162
      %p169 = scmp.eq.s32.totalorder %s28, 1
      %p170 = por %p168, %p169
      %p171 = scmp.ne.s32.totalorder %s163, %s166
      %p172 = scmp.eq.s32.totalorder %s28, 0
      %p173 = por %p171, %p172
      %p174 = scmp.ne.s32.totalorder %s163, %s166
      %p175 = scmp.eq.s32.totalorder %s33, 1
      %p176 = por %p174, %p175
      %p177 = scmp.ne.s32.totalorder %s166, %s167
      %p178 = scmp.eq.s32.totalorder %s33, 0
      %p179 = por %p177, %p178
      %p180 = scmp.ne.s32.totalorder %s166, %s167
      %p181 = scmp.eq.s32.totalorder %s34, 1
      %p182 = por %p180, %p181
      %p184 = scmp.ne.s32.totalorder %s167, %s183
      %p185 = scmp.eq.s32.totalorder %s34, 0
      %p186 = por %p184, %p185
      %s187 = ssub.s32 %s28, %s35
      %p188 = scmp.eq.s32.totalorder %s187, 0
      %s190 = sadd.s32 %s189, 1
      %s191 = scalar_select %p188, %s189, %s190
      %p194 = pneg %p188
      %p195 = scmp.eq.s32.totalorder %s28, 1
      %p196 = por %p194, %p195
      %p197 = scmp.ne.s32.totalorder %s189, %s192
      %p198 = scmp.eq.s32.totalorder %s28, 0
      %p199 = por %p197, %p198
      %p200 = scmp.ne.s32.totalorder %s189, %s192
      %p201 = scmp.eq.s32.totalorder %s33, 1
      %p202 = por %p200, %p201
      %p203 = scmp.ne.s32.totalorder %s192, %s193
      %p204 = scmp.eq.s32.totalorder %s33, 0
      %p205 = por %p203, %p204
      %p206 = scmp.ne.s32.totalorder %s192, %s193
      %p207 = scmp.eq.s32.totalorder %s34, 1
      %p208 = por %p206, %p207
      %p210 = scmp.ne.s32.totalorder %s193, %s209
      %p211 = scmp.eq.s32.totalorder %s34, 0
      %p212 = por %p210, %p211
      %s213 = ssub.s32 %s28, %s35
      %p214 = scmp.eq.s32.totalorder %s213, 0
      %s216 = sadd.s32 %s215, 1
      %s217 = scalar_select %p214, %s215, %s216
      %p220 = pneg %p214
      %p221 = scmp.eq.s32.totalorder %s28, 1
      %p222 = por %p220, %p221
      %p223 = scmp.ne.s32.totalorder %s215, %s218
      %p224 = scmp.eq.s32.totalorder %s28, 0
      %p225 = por %p223, %p224
      %p226 = scmp.ne.s32.totalorder %s215, %s218
      %p227 = scmp.eq.s32.totalorder %s33, 1
      %p228 = por %p226, %p227
      %p229 = scmp.ne.s32.totalorder %s218, %s219
      %p230 = scmp.eq.s32.totalorder %s33, 0
      %p231 = por %p229, %p230
      %p232 = scmp.ne.s32.totalorder %s218, %s219
      %p233 = scmp.eq.s32.totalorder %s34, 1
      %p234 = por %p232, %p233
      %p236 = scmp.ne.s32.totalorder %s219, %s235
      %p237 = scmp.eq.s32.totalorder %s34, 0
      %p238 = por %p236, %p237
      %s240 = sadd.s32 %s239, 1
      %p243 = scmp.eq.s32.totalorder %s28, 1
      %p244 = scmp.ne.s32.totalorder %s239, %s241
      %p245 = scmp.eq.s32.totalorder %s28, 0
      %p246 = por %p244, %p245
      %p247 = scmp.ne.s32.totalorder %s239, %s241
      %p248 = scmp.eq.s32.totalorder %s33, 1
      %p249 = por %p247, %p248
      %p250 = scmp.ne.s32.totalorder %s241, %s242
      %p251 = scmp.eq.s32.totalorder %s33, 0
      %p252 = por %p250, %p251
      %p253 = scmp.ne.s32.totalorder %s241, %s242
      %p254 = scmp.eq.s32.totalorder %s34, 1
      %p255 = por %p253, %p254
      %p257 = scmp.ne.s32.totalorder %s242, %s256
      %p258 = scmp.eq.s32.totalorder %s34, 0
      %p259 = por %p257, %p258
      %p260 = scmp.le.s32.totalorder 1, %s28
      %p261 = scmp.lt.s32.totalorder %s28, 3
      %p262 = pnand %p260, %p261
      %p263 = pneg %p262
      // Predicated region
      $region9: #{tpu_custom_call.1} parent=5 // pred_check
        _
      $region10: #{tpu_custom_call.1} parent=5 // pred_check_branch
        %265 = sbr.rel (%p262) target = $region12
      $region11: #{tpu_custom_call.1} parent=5 // pred_region
        %s266 = ssub.s32 %s28, 1
        // Predicated region
        $region13: #{tpu_custom_call.1} parent=11 // pred_check
          %p267 = pneg %p49
        $region14: #{tpu_custom_call.1} parent=11 // pred_check_branch
          %269 = sbr.rel (%p267) target = $region16
        $region15: #{tpu_custom_call.1} parent=11 // pred_region
          %s271 = ssub.s32 128, 128
          %272 = vsyncadd [#allocation3], %s271
          %s274 = sshll.u32 [#allocation2], 4
          %s275 = int_to_ptr.vmem [resolvable:$true] %s274
          %277 = dma.hbm_to_vmem [thread:$0]  %s0, 128, %s275, [#allocation3]
        $region16: #{tpu_custom_call.1} parent=11 // pred_fallthru
          _
      $region12: #{tpu_custom_call.1} parent=5 // pred_fallthru
        _
      %p278 = scmp.lt.s32.totalorder %s28, 2
      // Predicated region
      $region17: #{tpu_custom_call.1} parent=5 // pred_check
        %p279 = pneg %p278
      $region18: #{tpu_custom_call.1} parent=5 // pred_check_branch
        %281 = sbr.rel (%p279) target = $region20
      $region19: #{tpu_custom_call.1} parent=5 // pred_region
        // Predicated region
        $region21: #{tpu_custom_call.1} parent=19 // pred_check
          %p282 = pneg %p69
        $region22: #{tpu_custom_call.1} parent=19 // pred_check_branch
          %284 = sbr.rel (%p282) target = $region24
        $region23: #{tpu_custom_call.1} parent=19 // pred_region
          %s285 = sand.u32 %s28, 1
          %s286 = scalar_lea.sflag [#allocation6], %s285
          %s287 = sand.u32 %s59, 1
          %s288 = smul.addr %s287, 16
          %s289 = scalar_lea.vmem [#allocation5], %s288
          %s291 = ssub.s32 256, 256
          %292 = vsyncadd %s286, %s291
          %s293 = smul.addr %s28, 4
          %s294 = smul.addr %s293, 64
          %s295 = scalar_lea.hbm %s1, %s294
          %s296 = sshll.u32 %s289, 4
          %s297 = int_to_ptr.vmem [resolvable:$true] %s296
          %302 = dma.hbm_to_vmem [thread:$0]  %s295, 256, %s297, %s286, 64, 64, 4
        $region24: #{tpu_custom_call.1} parent=19 // pred_fallthru
          _
        // Predicated region
        $region25: #{tpu_custom_call.1} parent=19 // pred_check
          %p303 = pneg %p95
        $region26: #{tpu_custom_call.1} parent=19 // pred_check_branch
          %305 = sbr.rel (%p303) target = $region28
        $region27: #{tpu_custom_call.1} parent=19 // pred_region
          %s306 = sand.u32 %s28, 1
          %s307 = scalar_lea.sflag [#allocation6], %s306
          %s308 = sand.u32 %s85, 1
          %s309 = scalar_lea.vmem [#allocation7], %s308
          %s311 = ssub.s32 16, 16
          %312 = vsyncadd %s307, %s311
          %s313 = smul.addr %s28, 16
          %s314 = scalar_lea.hbm %s2, %s313
          %s316 = sshll.u32 %s309, 4
          %s317 = int_to_ptr.vmem [resolvable:$true] %s316
          %319 = dma.hbm_to_vmem [thread:$0]  %s314, 16, %s317, %s307
        $region28: #{tpu_custom_call.1} parent=19 // pred_fallthru
          _
        // Predicated region
        $region29: #{tpu_custom_call.1} parent=19 // pred_check
          %p320 = pneg %p121
        $region30: #{tpu_custom_call.1} parent=19 // pred_check_branch
          %322 = sbr.rel (%p320) target = $region32
        $region31: #{tpu_custom_call.1} parent=19 // pred_region
          %s323 = sand.u32 %s28, 1
          %s324 = scalar_lea.sflag [#allocation9], %s323
          %s325 = sand.u32 %s111, 1
          %s326 = smul.addr %s325, 16
          %s327 = scalar_lea.vmem [#allocation8], %s326
          %s329 = ssub.s32 256, 256
          %330 = vsyncadd %s324, %s329
          %s331 = smul.addr %s28, 4
          %s332 = smul.addr %s331, 64
          %s333 = scalar_lea.hbm %s3, %s332
          %s334 = sshll.u32 %s327, 4
          %s335 = int_to_ptr.vmem [resolvable:$true] %s334
          %340 = dma.hbm_to_vmem [thread:$0]  %s333, 256, %s335, %s324, 64, 64, 4
        $region32: #{tpu_custom_call.1} parent=19 // pred_fallthru
          _
        // Predicated region
        $region33: #{tpu_custom_call.1} parent=19 // pred_check
          %p341 = pneg %p147
        $region34: #{tpu_custom_call.1} parent=19 // pred_check_branch
          %343 = sbr.rel (%p341) target = $region36
        $region35: #{tpu_custom_call.1} parent=19 // pred_region
          %s344 = sand.u32 %s28, 1
          %s345 = scalar_lea.sflag [#allocation9], %s344
          %s346 = sand.u32 %s137, 1
          %s347 = smul.addr %s346, 16
          %s348 = scalar_lea.vmem [#allocation10], %s347
          %s350 = ssub.s32 256, 256
          %351 = vsyncadd %s345, %s350
          %s352 = smul.addr %s28, 4
          %s353 = smul.addr %s352, 64
          %s354 = scalar_lea.hbm %s4, %s353
          %s355 = sshll.u32 %s348, 4
          %s356 = int_to_ptr.vmem [resolvable:$true] %s355
          %361 = dma.hbm_to_vmem [thread:$0]  %s354, 256, %s356, %s345, 64, 64, 4
        $region36: #{tpu_custom_call.1} parent=19 // pred_fallthru
          _
        // Predicated region
        $region37: #{tpu_custom_call.1} parent=19 // pred_check
          %p362 = pneg %p173
        $region38: #{tpu_custom_call.1} parent=19 // pred_check_branch
          %364 = sbr.rel (%p362) target = $region40
        $region39: #{tpu_custom_call.1} parent=19 // pred_region
          %s365 = sand.u32 %s28, 1
          %s366 = scalar_lea.sflag [#allocation12], %s365
          %s367 = sand.u32 %s163, 1
          %s368 = scalar_lea.vmem [#allocation11], %s367
          %s370 = ssub.s32 16, 16
          %371 = vsyncadd %s366, %s370
          %s372 = smul.addr %s28, 16
          %s373 = scalar_lea.hbm %s5, %s372
          %s375 = sshll.u32 %s368, 4
          %s376 = int_to_ptr.vmem [resolvable:$true] %s375
          %378 = dma.hbm_to_vmem [thread:$0]  %s373, 16, %s376, %s366
        $region40: #{tpu_custom_call.1} parent=19 // pred_fallthru
          _
        // Predicated region
        $region41: #{tpu_custom_call.1} parent=19 // pred_check
          %p379 = pneg %p199
        $region42: #{tpu_custom_call.1} parent=19 // pred_check_branch
          %381 = sbr.rel (%p379) target = $region44
        $region43: #{tpu_custom_call.1} parent=19 // pred_region
          %s382 = sand.u32 %s28, 1
          %s383 = scalar_lea.sflag [#allocation12], %s382
          %s384 = sand.u32 %s189, 1
          %s385 = smul.addr %s384, 32
          %s386 = scalar_lea.vmem [#allocation13], %s385
          %s388 = ssub.s32 512, 512
          %389 = vsyncadd %s383, %s388
          %s390 = smul.addr %s28, 8
          %s391 = smul.addr %s390, 64
          %s392 = scalar_lea.hbm %s6, %s391
          %s393 = sshll.u32 %s386, 4
          %s394 = int_to_ptr.vmem [resolvable:$true] %s393
          %399 = dma.hbm_to_vmem [thread:$0]  %s392, 512, %s394, %s383, 64, 64, 4
        $region44: #{tpu_custom_call.1} parent=19 // pred_fallthru
          _
        // Predicated region
        $region45: #{tpu_custom_call.1} parent=19 // pred_check
          %p400 = pneg %p225
        $region46: #{tpu_custom_call.1} parent=19 // pred_check_branch
          %402 = sbr.rel (%p400) target = $region48
        $region47: #{tpu_custom_call.1} parent=19 // pred_region
          %s403 = sand.u32 %s215, 1
          %s404 = scalar_lea.sflag [#allocation15], %s403
          %s405 = sand.u32 %s215, 1
          %s406 = smul.addr %s405, 8
          %s407 = scalar_lea.vmem [#allocation14], %s406
          %s409 = ssub.s32 128, 128
          %410 = vsyncadd %s404, %s409
          %s411 = smul.addr %s28, 128
          %s412 = scalar_lea.hbm %s7, %s411
          %s414 = sshll.u32 %s407, 4
          %s415 = int_to_ptr.vmem [resolvable:$true] %s414
          %417 = dma.hbm_to_vmem [thread:$0]  %s412, 128, %s415, %s404
        $region48: #{tpu_custom_call.1} parent=19 // pred_fallthru
          _
      $region20: #{tpu_custom_call.1} parent=5 // pred_fallthru
        _
      %p418 = scmp.le.s32.totalorder 1, %s28
      %p419 = scmp.lt.s32.totalorder %s28, 3
      %p420 = pnand %p418, %p419
      %p421 = pneg %p420
      // Predicated region
      $region49: #{tpu_custom_call.1} parent=5 // pred_check
        _
      $region50: #{tpu_custom_call.1} parent=5 // pred_check_branch
        %423 = sbr.rel (%p420) target = $region52
      $region51: #{tpu_custom_call.1} parent=5 // pred_region
        %s424 = ssub.s32 %s28, 1
        // Predicated region
        $region53: #{tpu_custom_call.1} parent=51 // pred_check
          %p425 = pneg %p49
        $region54: #{tpu_custom_call.1} parent=51 // pred_check_branch
          %427 = sbr.rel (%p425) target = $region56
        $region55: #{tpu_custom_call.1} parent=51 // pred_region
          %428 = dma.done [#allocation3], 128
        $region56: #{tpu_custom_call.1} parent=51 // pred_fallthru
          _
        %s429 = sand.u32 %s33, 1
        %s430 = scalar_lea.sflag [#allocation6], %s429
        %s431 = sand.u32 %s62, 1
        %s432 = smul.addr %s431, 16
        %s433 = scalar_lea.vmem [#allocation5], %s432
        // Predicated region
        $region57: #{tpu_custom_call.1} parent=51 // pred_check
          %p434 = pneg %p75
        $region58: #{tpu_custom_call.1} parent=51 // pred_check_branch
          %436 = sbr.rel (%p434) target = $region60
        $region59: #{tpu_custom_call.1} parent=51 // pred_region
          %437 = dma.done %s430, 256
        $region60: #{tpu_custom_call.1} parent=51 // pred_fallthru
          _
        %s438 = sand.u32 %s33, 1
        %s439 = scalar_lea.sflag [#allocation6], %s438
        %s440 = sand.u32 %s88, 1
        %s441 = scalar_lea.vmem [#allocation7], %s440
        // Predicated region
        $region61: #{tpu_custom_call.1} parent=51 // pred_check
          %p442 = pneg %p101
        $region62: #{tpu_custom_call.1} parent=51 // pred_check_branch
          %444 = sbr.rel (%p442) target = $region64
        $region63: #{tpu_custom_call.1} parent=51 // pred_region
          %445 = dma.done %s439, 16
        $region64: #{tpu_custom_call.1} parent=51 // pred_fallthru
          _
        %s446 = sand.u32 %s33, 1
        %s447 = scalar_lea.sflag [#allocation9], %s446
        %s448 = sand.u32 %s114, 1
        %s449 = smul.addr %s448, 16
        %s450 = scalar_lea.vmem [#allocation8], %s449
        // Predicated region
        $region65: #{tpu_custom_call.1} parent=51 // pred_check
          %p451 = pneg %p127
        $region66: #{tpu_custom_call.1} parent=51 // pred_check_branch
          %453 = sbr.rel (%p451) target = $region68
        $region67: #{tpu_custom_call.1} parent=51 // pred_region
          %454 = dma.done %s447, 256
        $region68: #{tpu_custom_call.1} parent=51 // pred_fallthru
          _
        %s455 = sand.u32 %s33, 1
        %s456 = scalar_lea.sflag [#allocation9], %s455
        %s457 = sand.u32 %s140, 1
        %s458 = smul.addr %s457, 16
        %s459 = scalar_lea.vmem [#allocation10], %s458
        // Predicated region
        $region69: #{tpu_custom_call.1} parent=51 // pred_check
          %p460 = pneg %p153
        $region70: #{tpu_custom_call.1} parent=51 // pred_check_branch
          %462 = sbr.rel (%p460) target = $region72
        $region71: #{tpu_custom_call.1} parent=51 // pred_region
          %463 = dma.done %s456, 256
        $region72: #{tpu_custom_call.1} parent=51 // pred_fallthru
          _
        %s464 = sand.u32 %s33, 1
        %s465 = scalar_lea.sflag [#allocation12], %s464
        %s466 = sand.u32 %s166, 1
        %s467 = scalar_lea.vmem [#allocation11], %s466
        // Predicated region
        $region73: #{tpu_custom_call.1} parent=51 // pred_check
          %p468 = pneg %p179
        $region74: #{tpu_custom_call.1} parent=51 // pred_check_branch
          %470 = sbr.rel (%p468) target = $region76
        $region75: #{tpu_custom_call.1} parent=51 // pred_region
          %471 = dma.done %s465, 16
        $region76: #{tpu_custom_call.1} parent=51 // pred_fallthru
          _
        %s472 = sand.u32 %s33, 1
        %s473 = scalar_lea.sflag [#allocation12], %s472
        %s474 = sand.u32 %s192, 1
        %s475 = smul.addr %s474, 32
        %s476 = scalar_lea.vmem [#allocation13], %s475
        // Predicated region
        $region77: #{tpu_custom_call.1} parent=51 // pred_check
          %p477 = pneg %p205
        $region78: #{tpu_custom_call.1} parent=51 // pred_check_branch
          %479 = sbr.rel (%p477) target = $region80
        $region79: #{tpu_custom_call.1} parent=51 // pred_region
          %480 = dma.done %s473, 512
        $region80: #{tpu_custom_call.1} parent=51 // pred_fallthru
          _
        %s481 = sand.u32 %s218, 1
        %s482 = scalar_lea.sflag [#allocation15], %s481
        %s483 = sand.u32 %s218, 1
        %s484 = smul.addr %s483, 8
        %s485 = scalar_lea.vmem [#allocation14], %s484
        // Predicated region
        $region81: #{tpu_custom_call.1} parent=51 // pred_check
          %p486 = pneg %p231
        $region82: #{tpu_custom_call.1} parent=51 // pred_check_branch
          %488 = sbr.rel (%p486) target = $region84
        $region83: #{tpu_custom_call.1} parent=51 // pred_region
          %489 = dma.done %s482, 128
        $region84: #{tpu_custom_call.1} parent=51 // pred_fallthru
          _
        %p490 = pneg %p49
        %p491 = pneg %p46
        %s492 = sand.u32 %s33, 1
        %s493 = scalar_lea.sflag [#allocation6], %s492
        %s494 = sand.u32 %s62, 1
        %s495 = smul.addr %s494, 16
        %s496 = scalar_lea.vmem [#allocation5], %s495
        %p497 = pneg %p75
        %p498 = pneg %p72
        %s499 = sand.u32 %s33, 1
        %s500 = scalar_lea.sflag [#allocation6], %s499
        %s501 = sand.u32 %s88, 1
        %s502 = scalar_lea.vmem [#allocation7], %s501
        %p503 = pneg %p101
        %p504 = pneg %p98
        %s505 = sand.u32 %s33, 1
        %s506 = scalar_lea.sflag [#allocation9], %s505
        %s507 = sand.u32 %s114, 1
        %s508 = smul.addr %s507, 16
        %s509 = scalar_lea.vmem [#allocation8], %s508
        %p510 = pneg %p127
        %p511 = pneg %p124
        %s512 = sand.u32 %s33, 1
        %s513 = scalar_lea.sflag [#allocation9], %s512
        %s514 = sand.u32 %s140, 1
        %s515 = smul.addr %s514, 16
        %s516 = scalar_lea.vmem [#allocation10], %s515
        %p517 = pneg %p153
        %p518 = pneg %p150
        %s519 = sand.u32 %s33, 1
        %s520 = scalar_lea.sflag [#allocation12], %s519
        %s521 = sand.u32 %s166, 1
        %s522 = scalar_lea.vmem [#allocation11], %s521
        %p523 = pneg %p179
        %p524 = pneg %p176
        %s525 = sand.u32 %s33, 1
        %s526 = scalar_lea.sflag [#allocation12], %s525
        %s527 = sand.u32 %s192, 1
        %s528 = smul.addr %s527, 32
        %s529 = scalar_lea.vmem [#allocation13], %s528
        %p530 = pneg %p205
        %p531 = pneg %p202
        %s532 = sand.u32 %s218, 1
        %s533 = scalar_lea.sflag [#allocation15], %s532
        %s534 = sand.u32 %s218, 1
        %s535 = smul.addr %s534, 8
        %s536 = scalar_lea.vmem [#allocation14], %s535
        %p537 = pneg %p231
        %p538 = pneg %p228
        %p539 = pneg %p252
        %p540 = pneg %p249
        %p542 = scmp.eq.s32.totalorder %s33, 0
        // Predicated region
        $region85: #{tpu_custom_call.1} parent=51 // pred_check
          %p543 = pneg %p542
        $region86: #{tpu_custom_call.1} parent=51 // pred_check_branch
          %545 = sbr.rel (%p543) target = $region88
        $region87: #{tpu_custom_call.1} parent=51 // pred_region
          %v546 = vld [vmem:[#allocation2] sm:$0xff]
          %vm547 = vcmask 261120
          %548 = vst.msk [vmem:[#allocation16] sm:$0xff] %vm547, %v546
        $region88: #{tpu_custom_call.1} parent=51 // pred_fallthru
          _
        %v549 = vld [vmem:[#allocation16] sm:$0xff]
        %v550 = vpack.c.bf16 %v549, %v549
        %v551 = vld [vmem:[%s433] sm:$0xf]
        %v552 = vld [vmem:[%s433 + $0x4] sm:$0xf]
        %v553 = vld [vmem:[%s433 + $0x8] sm:$0xf]
        %v554 = vld [vmem:[%s433 + $0xc] sm:$0xf]
        %v555 = vld [vmem:[%s441] sm:$0x1]
        %v557 = vlaneseq
        %v558 = vshrl.u32 %v557, 7
        %v559 = vsub.s32 0, %v558
        %v560 = vrot.slane %v555, %v559
        %v566 = vunpack.c.l.b16 %v551
        %v567 = vunpack.c.l.b16 %v552
        %v568 = vunpack.c.l.b16 %v553
        %v569 = vunpack.c.l.b16 %v554
        %v570 = vpack.c.b16 %v567, %v566
        %v571 = vpack.c.b16 %v569, %v568
        %vm574 = vcmask 261120
        %v576 = vsel %vm574, %v550, 0
        %578 = vmatprep.subr.bf16.mxu0 0
        %579 = vmatpush1.bf16.msra.mxu0 %v570
        %580 = vmatprep.subr.bf16.mxu0 0
        %581 = vmatpush1.bf16.msra.mxu0 %v571
        %582 = vmatprep.subr.bf16.mxu0 0
        %583 = vmatpush1.bf16.msra.mxu0 0
        %584 = vmatprep.subr.bf16.mxu0 0
        %585 = vmatpush1.bf16.msra.mxu0 0
        %586 = vmatprep.subr.bf16.mxu0 0
        %587 = vmatpush1.bf16.msra.mxu0 0
        %588 = vmatprep.subr.bf16.mxu0 0
        %589 = vmatpush1.bf16.msra.mxu0 0
        %590 = vmatprep.subr.bf16.mxu0 0
        %591 = vmatpush1.bf16.msra.mxu0 0
        %592 = vmatprep.subr.bf16.mxu0 0
        %593 = vmatpush1.bf16.msra.mxu0 0
        %594 = vmatprep.subr.bf16.mxu0 0
        %595 = vmatpush1.bf16.msra.mxu0 0
        %596 = vmatprep.subr.bf16.mxu0 0
        %597 = vmatpush1.bf16.msra.mxu0 0
        %598 = vmatprep.subr.bf16.mxu0 0
        %599 = vmatpush1.bf16.msra.mxu0 0
        %600 = vmatprep.subr.bf16.mxu0 0
        %601 = vmatpush1.bf16.msra.mxu0 0
        %602 = vmatprep.subr.bf16.mxu0 0
        %603 = vmatpush1.bf16.msra.mxu0 0
        %604 = vmatprep.subr.bf16.mxu0 0
        %605 = vmatpush1.bf16.msra.mxu0 0
        %606 = vmatprep.subr.bf16.mxu0 0
        %607 = vmatpush1.bf16.msra.mxu0 0
        %608 = vmatprep.subr.bf16.mxu0 0
        %609 = vmatpush1.bf16.msra.mxu0 0
        %610 = vmatprep.mubr.bf16.mxu0 0
        %611 = vmatmul.mubr.bf16.gmra.mrb[0].mxu0 %v576
        %v612 = vpop.f32.mrb[0].mxu0
        %v613 = vadd.f32 %v560, %v612
        %v614 = vpop.f32.mrb[0].mxu0
        %v615 = vpop.f32.mrb[0].mxu0
        %v616 = vpop.f32.mrb[0].mxu0
        %617 = vdwg.mxu0
        %v618 = vmul.f32 %v613, 0.35355338
        %620 = vrot.lane.b32.xlu0 %v618, 120
        %v621 = vpop.permute.xlu0 %620
        %623 = vrot.lane.b32.xlu0 %v618, 112
        %v624 = vpop.permute.xlu0 %623
        %626 = vrot.lane.b32.xlu0 %v618, 104
        %v627 = vpop.permute.xlu0 %626
        %v629 = vpack.c.bf16 %v618, %v618
        %v630 = vpack.c.bf16 %v621, %v621
        %v631 = vpack.c.bf16 %v624, %v624
        %v632 = vpack.c.bf16 %v627, %v627
        %634 = vrot.lane.b32.xlu0 %v613, 120
        %v635 = vpop.permute.xlu0 %634
        %637 = vrot.lane.b32.xlu0 %v613, 112
        %v638 = vpop.permute.xlu0 %637
        %640 = vrot.lane.b32.xlu0 %v613, 104
        %v641 = vpop.permute.xlu0 %640
        %v643 = vpack.c.bf16 %v613, %v613
        %v644 = vpack.c.bf16 %v635, %v635
        %v645 = vpack.c.bf16 %v638, %v638
        %v646 = vpack.c.bf16 %v641, %v641
        %648 = vrot.lane.b32.xlu0 %v643, 96
        %v649 = vpop.permute.xlu0 %648
        %vm650 = vcmask 64512
        %v652 = vsel %vm650, %v629, 0
        %v655 = vsel %vm650, %v649, 0
        %657 = vmatprep.subr.bf16.mxu0 0
        %658 = vmatpush1.bf16.xpose.msra.mxu0 %v655
        %659 = vmatprep.subr.bf16.mxu0 0
        %660 = vmatpush1.bf16.xpose.msra.mxu0 0
        %661 = vmatprep.subr.bf16.mxu0 0
        %662 = vmatpush1.bf16.xpose.msra.mxu0 0
        %663 = vmatprep.subr.bf16.mxu0 0
        %664 = vmatpush1.bf16.xpose.msra.mxu0 0
        %665 = vmatprep.subr.bf16.mxu0 0
        %666 = vmatpush1.bf16.xpose.msra.mxu0 0
        %667 = vmatprep.subr.bf16.mxu0 0
        %668 = vmatpush1.bf16.xpose.msra.mxu0 0
        %669 = vmatprep.subr.bf16.mxu0 0
        %670 = vmatpush1.bf16.xpose.msra.mxu0 0
        %671 = vmatprep.subr.bf16.mxu0 0
        %672 = vmatpush1.bf16.xpose.msra.mxu0 0
        %673 = vmatprep.subr.bf16.mxu0 0
        %674 = vmatpush1.bf16.xpose.msra.mxu0 0
        %675 = vmatprep.subr.bf16.mxu0 0
        %676 = vmatpush1.bf16.xpose.msra.mxu0 0
        %677 = vmatprep.subr.bf16.mxu0 0
        %678 = vmatpush1.bf16.xpose.msra.mxu0 0
        %679 = vmatprep.subr.bf16.mxu0 0
        %680 = vmatpush1.bf16.xpose.msra.mxu0 0
        %681 = vmatprep.subr.bf16.mxu0 0
        %682 = vmatpush1.bf16.xpose.msra.mxu0 0
        %683 = vmatprep.subr.bf16.mxu0 0
        %684 = vmatpush1.bf16.xpose.msra.mxu0 0
        %685 = vmatprep.subr.bf16.mxu0 0
        %686 = vmatpush1.bf16.xpose.msra.mxu0 0
        %687 = vmatprep.subr.bf16.mxu0 0
        %688 = vmatpush1.bf16.xpose.msra.mxu0 0
        %689 = vmatprep.mubr.bf16.mxu0 0
        %690 = vmatmul.mubr.bf16.gmra.mrb[0].mxu0 %v652
        %v691 = vpop.f32.mrb[0].mxu0
        %v692 = vadd.f32 0.0, %v691
        %v693 = vpop.f32.mrb[0].mxu0
        %v694 = vpop.f32.mrb[0].mxu0
        %v695 = vpop.f32.mrb[0].mxu0
        %696 = vdwg.mxu0
        %698 = vrot.lane.b32.xlu0 %v644, 96
        %v699 = vpop.permute.xlu0 %698
        %v701 = vsel %vm650, %v630, 0
        %v704 = vsel %vm650, %v699, 0
        %706 = vmatprep.subr.bf16.mxu0 0
        %707 = vmatpush1.bf16.xpose.msra.mxu0 %v704
        %708 = vmatprep.subr.bf16.mxu0 0
        %709 = vmatpush1.bf16.xpose.msra.mxu0 0
        %710 = vmatprep.subr.bf16.mxu0 0
        %711 = vmatpush1.bf16.xpose.msra.mxu0 0
        %712 = vmatprep.subr.bf16.mxu0 0
        %713 = vmatpush1.bf16.xpose.msra.mxu0 0
        %714 = vmatprep.subr.bf16.mxu0 0
        %715 = vmatpush1.bf16.xpose.msra.mxu0 0
        %716 = vmatprep.subr.bf16.mxu0 0
        %717 = vmatpush1.bf16.xpose.msra.mxu0 0
        %718 = vmatprep.subr.bf16.mxu0 0
        %719 = vmatpush1.bf16.xpose.msra.mxu0 0
        %720 = vmatprep.subr.bf16.mxu0 0
        %721 = vmatpush1.bf16.xpose.msra.mxu0 0
        %722 = vmatprep.subr.bf16.mxu0 0
        %723 = vmatpush1.bf16.xpose.msra.mxu0 0
        %724 = vmatprep.subr.bf16.mxu0 0
        %725 = vmatpush1.bf16.xpose.msra.mxu0 0
        %726 = vmatprep.subr.bf16.mxu0 0
        %727 = vmatpush1.bf16.xpose.msra.mxu0 0
        %728 = vmatprep.subr.bf16.mxu0 0
        %729 = vmatpush1.bf16.xpose.msra.mxu0 0
        %730 = vmatprep.subr.bf16.mxu0 0
        %731 = vmatpush1.bf16.xpose.msra.mxu0 0
        %732 = vmatprep.subr.bf16.mxu0 0
        %733 = vmatpush1.bf16.xpose.msra.mxu0 0
        %734 = vmatprep.subr.bf16.mxu0 0
        %735 = vmatpush1.bf16.xpose.msra.mxu0 0
        %736 = vmatprep.subr.bf16.mxu0 0
        %737 = vmatpush1.bf16.xpose.msra.mxu0 0
        %738 = vmatprep.mubr.bf16.mxu0 0
        %739 = vmatmul.mubr.bf16.gmra.mrb[0].mxu0 %v701
        %v740 = vpop.f32.mrb[0].mxu0
        %v741 = vadd.f32 0.0, %v740
        %v742 = vpop.f32.mrb[0].mxu0
        %v743 = vpop.f32.mrb[0].mxu0
        %v744 = vpop.f32.mrb[0].mxu0
        %745 = vdwg.mxu0
        %747 = vrot.lane.b32.xlu0 %v645, 96
        %v748 = vpop.permute.xlu0 %747
        %v750 = vsel %vm650, %v631, 0
        %v753 = vsel %vm650, %v748, 0
        %755 = vmatprep.subr.bf16.mxu0 0
        %756 = vmatpush1.bf16.xpose.msra.mxu0 %v753
        %757 = vmatprep.subr.bf16.mxu0 0
        %758 = vmatpush1.bf16.xpose.msra.mxu0 0
        %759 = vmatprep.subr.bf16.mxu0 0
        %760 = vmatpush1.bf16.xpose.msra.mxu0 0
        %761 = vmatprep.subr.bf16.mxu0 0
        %762 = vmatpush1.bf16.xpose.msra.mxu0 0
        %763 = vmatprep.subr.bf16.mxu0 0
        %764 = vmatpush1.bf16.xpose.msra.mxu0 0
        %765 = vmatprep.subr.bf16.mxu0 0
        %766 = vmatpush1.bf16.xpose.msra.mxu0 0
        %767 = vmatprep.subr.bf16.mxu0 0
        %768 = vmatpush1.bf16.xpose.msra.mxu0 0
        %769 = vmatprep.subr.bf16.mxu0 0
        %770 = vmatpush1.bf16.xpose.msra.mxu0 0
        %771 = vmatprep.subr.bf16.mxu0 0
        %772 = vmatpush1.bf16.xpose.msra.mxu0 0
        %773 = vmatprep.subr.bf16.mxu0 0
        %774 = vmatpush1.bf16.xpose.msra.mxu0 0
        %775 = vmatprep.subr.bf16.mxu0 0
        %776 = vmatpush1.bf16.xpose.msra.mxu0 0
        %777 = vmatprep.subr.bf16.mxu0 0
        %778 = vmatpush1.bf16.xpose.msra.mxu0 0
        %779 = vmatprep.subr.bf16.mxu0 0
        %780 = vmatpush1.bf16.xpose.msra.mxu0 0
        %781 = vmatprep.subr.bf16.mxu0 0
        %782 = vmatpush1.bf16.xpose.msra.mxu0 0
        %783 = vmatprep.subr.bf16.mxu0 0
        %784 = vmatpush1.bf16.xpose.msra.mxu0 0
        %785 = vmatprep.subr.bf16.mxu0 0
        %786 = vmatpush1.bf16.xpose.msra.mxu0 0
        %787 = vmatprep.mubr.bf16.mxu0 0
        %788 = vmatmul.mubr.bf16.gmra.mrb[0].mxu0 %v750
        %v789 = vpop.f32.mrb[0].mxu0
        %v790 = vadd.f32 0.0, %v789
        %v791 = vpop.f32.mrb[0].mxu0
        %v792 = vpop.f32.mrb[0].mxu0
        %v793 = vpop.f32.mrb[0].mxu0
        %794 = vdwg.mxu0
        %796 = vrot.lane.b32.xlu0 %v646, 96
        %v797 = vpop.permute.xlu0 %796
        %v799 = vsel %vm650, %v632, 0
        %v802 = vsel %vm650, %v797, 0
        %804 = vmatprep.subr.bf16.mxu0 0
        %805 = vmatpush1.bf16.xpose.msra.mxu0 %v802
        %806 = vmatprep.subr.bf16.mxu0 0
        %807 = vmatpush1.bf16.xpose.msra.mxu0 0
        %808 = vmatprep.subr.bf16.mxu0 0
        %809 = vmatpush1.bf16.xpose.msra.mxu0 0
        %810 = vmatprep.subr.bf16.mxu0 0
        %811 = vmatpush1.bf16.xpose.msra.mxu0 0
        %812 = vmatprep.subr.bf16.mxu0 0
        %813 = vmatpush1.bf16.xpose.msra.mxu0 0
        %814 = vmatprep.subr.bf16.mxu0 0
        %815 = vmatpush1.bf16.xpose.msra.mxu0 0
        %816 = vmatprep.subr.bf16.mxu0 0
        %817 = vmatpush1.bf16.xpose.msra.mxu0 0
        %818 = vmatprep.subr.bf16.mxu0 0
        %819 = vmatpush1.bf16.xpose.msra.mxu0 0
        %820 = vmatprep.subr.bf16.mxu0 0
        %821 = vmatpush1.bf16.xpose.msra.mxu0 0
        %822 = vmatprep.subr.bf16.mxu0 0
        %823 = vmatpush1.bf16.xpose.msra.mxu0 0
        %824 = vmatprep.subr.bf16.mxu0 0
        %825 = vmatpush1.bf16.xpose.msra.mxu0 0
        %826 = vmatprep.subr.bf16.mxu0 0
        %827 = vmatpush1.bf16.xpose.msra.mxu0 0
        %828 = vmatprep.subr.bf16.mxu0 0
        %829 = vmatpush1.bf16.xpose.msra.mxu0 0
        %830 = vmatprep.subr.bf16.mxu0 0
        %831 = vmatpush1.bf16.xpose.msra.mxu0 0
        %832 = vmatprep.subr.bf16.mxu0 0
        %833 = vmatpush1.bf16.xpose.msra.mxu0 0
        %834 = vmatprep.subr.bf16.mxu0 0
        %835 = vmatpush1.bf16.xpose.msra.mxu0 0
        %836 = vmatprep.mubr.bf16.mxu0 0
        %837 = vmatmul.mubr.bf16.gmra.mrb[0].mxu0 %v799
        %v838 = vpop.f32.mrb[0].mxu0
        %v839 = vadd.f32 0.0, %v838
        %v840 = vpop.f32.mrb[0].mxu0
        %v841 = vpop.f32.mrb[0].mxu0
        %v842 = vpop.f32.mrb[0].mxu0
        %843 = vdwg.mxu0
        %v844 = vsel %vm650, %v692, -inf
        %845 = vmax.xlane.f32.xlu0 %v844
        %v846 = vpop.xlane.xlu0 %845
        %v847 = vsel %vm650, %v741, -inf
        %848 = vmax.xlane.f32.xlu0 %v847
        %v849 = vpop.xlane.xlu0 %848
        %v850 = vsel %vm650, %v790, -inf
        %851 = vmax.xlane.f32.xlu0 %v850
        %v852 = vpop.xlane.xlu0 %851
        %v853 = vsel %vm650, %v839, -inf
        %854 = vmax.xlane.f32.xlu0 %v853
        %v855 = vpop.xlane.xlu0 %854
        %v856 = vsub.f32 %v692, %v846
        %v857 = vsub.f32 %v741, %v849
        %v858 = vsub.f32 %v790, %v852
        %v859 = vsub.f32 %v839, %v855
        %v860 = vmul.f32 %v856, 1.442695
        %v861 = vpow.pop %v860
        %v862 = vmul.f32 %v857, 1.442695
        %v863 = vpow.pop %v862
        %v864 = vmul.f32 %v858, 1.442695
        %v865 = vpow.pop %v864
        %v866 = vmul.f32 %v859, 1.442695
        %v867 = vpow.pop %v866
        %v868 = vsel %vm650, %v861, 0.0
        %869 = vadd.xlane.f32.xlu0 %v868
        %v870 = vpop.xlane.xlu0 %869
        %v871 = vsel %vm650, %v863, 0.0
        %872 = vadd.xlane.f32.xlu0 %v871
        %v873 = vpop.xlane.xlu0 %872
        %v874 = vsel %vm650, %v865, 0.0
        %875 = vadd.xlane.f32.xlu0 %v874
        %v876 = vpop.xlane.xlu0 %875
        %v877 = vsel %vm650, %v867, 0.0
        %878 = vadd.xlane.f32.xlu0 %v877
        %v879 = vpop.xlane.xlu0 %878
        %v880 = vrcp.pop %v870
        %v881 = vrcp.pop %v873
        %v882 = vrcp.pop %v876
        %v883 = vrcp.pop %v879
        %v884 = vmul.f32 %v861, %v880
        %v885 = vmul.f32 %v863, %v881
        %v886 = vmul.f32 %v865, %v882
        %v887 = vmul.f32 %v867, %v883
        %v888 = vpack.c.bf16 %v884, %v884
        %v889 = vpack.c.bf16 %v885, %v885
        %v890 = vpack.c.bf16 %v886, %v886
        %v891 = vpack.c.bf16 %v887, %v887
        %892 = vrot.lane.b32.xlu0 %v643, 64
        %v893 = vpop.permute.xlu0 %892
        %v895 = vsel %vm650, %v888, 0
        %vm897 = vcmask 1043456
        %v899 = vsel %vm897, %v893, 0
        %901 = vmatprep.subr.bf16.mxu0 0
        %902 = vmatpush1.bf16.msra.mxu0 %v899
        %903 = vmatprep.subr.bf16.mxu0 0
        %904 = vmatpush1.bf16.msra.mxu0 0
        %905 = vmatprep.subr.bf16.mxu0 0
        %906 = vmatpush1.bf16.msra.mxu0 0
        %907 = vmatprep.subr.bf16.mxu0 0
        %908 = vmatpush1.bf16.msra.mxu0 0
        %909 = vmatprep.subr.bf16.mxu0 0
        %910 = vmatpush1.bf16.msra.mxu0 0
        %911 = vmatprep.subr.bf16.mxu0 0
        %912 = vmatpush1.bf16.msra.mxu0 0
        %913 = vmatprep.subr.bf16.mxu0 0
        %914 = vmatpush1.bf16.msra.mxu0 0
        %915 = vmatprep.subr.bf16.mxu0 0
        %916 = vmatpush1.bf16.msra.mxu0 0
        %917 = vmatprep.subr.bf16.mxu0 0
        %918 = vmatpush1.bf16.msra.mxu0 0
        %919 = vmatprep.subr.bf16.mxu0 0
        %920 = vmatpush1.bf16.msra.mxu0 0
        %921 = vmatprep.subr.bf16.mxu0 0
        %922 = vmatpush1.bf16.msra.mxu0 0
        %923 = vmatprep.subr.bf16.mxu0 0
        %924 = vmatpush1.bf16.msra.mxu0 0
        %925 = vmatprep.subr.bf16.mxu0 0
        %926 = vmatpush1.bf16.msra.mxu0 0
        %927 = vmatprep.subr.bf16.mxu0 0
        %928 = vmatpush1.bf16.msra.mxu0 0
        %929 = vmatprep.subr.bf16.mxu0 0
        %930 = vmatpush1.bf16.msra.mxu0 0
        %931 = vmatprep.subr.bf16.mxu0 0
        %932 = vmatpush1.bf16.msra.mxu0 0
        %933 = vmatprep.mubr.bf16.mxu0 0
        %934 = vmatmul.mubr.bf16.gmra.mrb[0].mxu0 %v895
        %v935 = vpop.f32.mrb[0].mxu0
        %v936 = vadd.f32 0.0, %v935
        %v937 = vpop.f32.mrb[0].mxu0
        %v938 = vpop.f32.mrb[0].mxu0
        %v939 = vpop.f32.mrb[0].mxu0
        %940 = vdwg.mxu0
        %941 = vrot.lane.b32.xlu0 %v644, 64
        %v942 = vpop.permute.xlu0 %941
        %v944 = vsel %vm650, %v889, 0
        %v947 = vsel %vm897, %v942, 0
        %949 = vmatprep.subr.bf16.mxu0 0
        %950 = vmatpush1.bf16.msra.mxu0 %v947
        %951 = vmatprep.subr.bf16.mxu0 0
        %952 = vmatpush1.bf16.msra.mxu0 0
        %953 = vmatprep.subr.bf16.mxu0 0
        %954 = vmatpush1.bf16.msra.mxu0 0
        %955 = vmatprep.subr.bf16.mxu0 0
        %956 = vmatpush1.bf16.msra.mxu0 0
        %957 = vmatprep.subr.bf16.mxu0 0
        %958 = vmatpush1.bf16.msra.mxu0 0
        %959 = vmatprep.subr.bf16.mxu0 0
        %960 = vmatpush1.bf16.msra.mxu0 0
        %961 = vmatprep.subr.bf16.mxu0 0
        %962 = vmatpush1.bf16.msra.mxu0 0
        %963 = vmatprep.subr.bf16.mxu0 0
        %964 = vmatpush1.bf16.msra.mxu0 0
        %965 = vmatprep.subr.bf16.mxu0 0
        %966 = vmatpush1.bf16.msra.mxu0 0
        %967 = vmatprep.subr.bf16.mxu0 0
        %968 = vmatpush1.bf16.msra.mxu0 0
        %969 = vmatprep.subr.bf16.mxu0 0
        %970 = vmatpush1.bf16.msra.mxu0 0
        %971 = vmatprep.subr.bf16.mxu0 0
        %972 = vmatpush1.bf16.msra.mxu0 0
        %973 = vmatprep.subr.bf16.mxu0 0
        %974 = vmatpush1.bf16.msra.mxu0 0
        %975 = vmatprep.subr.bf16.mxu0 0
        %976 = vmatpush1.bf16.msra.mxu0 0
        %977 = vmatprep.subr.bf16.mxu0 0
        %978 = vmatpush1.bf16.msra.mxu0 0
        %979 = vmatprep.subr.bf16.mxu0 0
        %980 = vmatpush1.bf16.msra.mxu0 0
        %981 = vmatprep.mubr.bf16.mxu0 0
        %982 = vmatmul.mubr.bf16.gmra.mrb[0].mxu0 %v944
        %v983 = vpop.f32.mrb[0].mxu0
        %v984 = vadd.f32 0.0, %v983
        %v985 = vpop.f32.mrb[0].mxu0
        %v986 = vpop.f32.mrb[0].mxu0
        %v987 = vpop.f32.mrb[0].mxu0
        %988 = vdwg.mxu0
        %989 = vrot.lane.b32.xlu0 %v645, 64
        %v990 = vpop.permute.xlu0 %989
        %v992 = vsel %vm650, %v890, 0
        %v995 = vsel %vm897, %v990, 0
        %997 = vmatprep.subr.bf16.mxu0 0
        %998 = vmatpush1.bf16.msra.mxu0 %v995
        %999 = vmatprep.subr.bf16.mxu0 0
        %1000 = vmatpush1.bf16.msra.mxu0 0
        %1001 = vmatprep.subr.bf16.mxu0 0
        %1002 = vmatpush1.bf16.msra.mxu0 0
        %1003 = vmatprep.subr.bf16.mxu0 0
        %1004 = vmatpush1.bf16.msra.mxu0 0
        %1005 = vmatprep.subr.bf16.mxu0 0
        %1006 = vmatpush1.bf16.msra.mxu0 0
        %1007 = vmatprep.subr.bf16.mxu0 0
        %1008 = vmatpush1.bf16.msra.mxu0 0
        %1009 = vmatprep.subr.bf16.mxu0 0
        %1010 = vmatpush1.bf16.msra.mxu0 0
        %1011 = vmatprep.subr.bf16.mxu0 0
        %1012 = vmatpush1.bf16.msra.mxu0 0
        %1013 = vmatprep.subr.bf16.mxu0 0
        %1014 = vmatpush1.bf16.msra.mxu0 0
        %1015 = vmatprep.subr.bf16.mxu0 0
        %1016 = vmatpush1.bf16.msra.mxu0 0
        %1017 = vmatprep.subr.bf16.mxu0 0
        %1018 = vmatpush1.bf16.msra.mxu0 0
        %1019 = vmatprep.subr.bf16.mxu0 0
        %1020 = vmatpush1.bf16.msra.mxu0 0
        %1021 = vmatprep.subr.bf16.mxu0 0
        %1022 = vmatpush1.bf16.msra.mxu0 0
        %1023 = vmatprep.subr.bf16.mxu0 0
        %1024 = vmatpush1.bf16.msra.mxu0 0
        %1025 = vmatprep.subr.bf16.mxu0 0
        %1026 = vmatpush1.bf16.msra.mxu0 0
        %1027 = vmatprep.subr.bf16.mxu0 0
        %1028 = vmatpush1.bf16.msra.mxu0 0
        %1029 = vmatprep.mubr.bf16.mxu0 0
        %1030 = vmatmul.mubr.bf16.gmra.mrb[0].mxu0 %v992
        %v1031 = vpop.f32.mrb[0].mxu0
        %v1032 = vadd.f32 0.0, %v1031
        %v1033 = vpop.f32.mrb[0].mxu0
        %v1034 = vpop.f32.mrb[0].mxu0
        %v1035 = vpop.f32.mrb[0].mxu0
        %1036 = vdwg.mxu0
        %1037 = vrot.lane.b32.xlu0 %v646, 64
        %v1038 = vpop.permute.xlu0 %1037
        %v1040 = vsel %vm650, %v891, 0
        %v1043 = vsel %vm897, %v1038, 0
        %1045 = vmatprep.subr.bf16.mxu0 0
        %1046 = vmatpush1.bf16.msra.mxu0 %v1043
        %1047 = vmatprep.subr.bf16.mxu0 0
        %1048 = vmatpush1.bf16.msra.mxu0 0
        %1049 = vmatprep.subr.bf16.mxu0 0
        %1050 = vmatpush1.bf16.msra.mxu0 0
        %1051 = vmatprep.subr.bf16.mxu0 0
        %1052 = vmatpush1.bf16.msra.mxu0 0
        %1053 = vmatprep.subr.bf16.mxu0 0
        %1054 = vmatpush1.bf16.msra.mxu0 0
        %1055 = vmatprep.subr.bf16.mxu0 0
        %1056 = vmatpush1.bf16.msra.mxu0 0
        %1057 = vmatprep.subr.bf16.mxu0 0
        %1058 = vmatpush1.bf16.msra.mxu0 0
        %1059 = vmatprep.subr.bf16.mxu0 0
        %1060 = vmatpush1.bf16.msra.mxu0 0
        %1061 = vmatprep.subr.bf16.mxu0 0
        %1062 = vmatpush1.bf16.msra.mxu0 0
        %1063 = vmatprep.subr.bf16.mxu0 0
        %1064 = vmatpush1.bf16.msra.mxu0 0
        %1065 = vmatprep.subr.bf16.mxu0 0
        %1066 = vmatpush1.bf16.msra.mxu0 0
        %1067 = vmatprep.subr.bf16.mxu0 0
        %1068 = vmatpush1.bf16.msra.mxu0 0
        %1069 = vmatprep.subr.bf16.mxu0 0
        %1070 = vmatpush1.bf16.msra.mxu0 0
        %1071 = vmatprep.subr.bf16.mxu0 0
        %1072 = vmatpush1.bf16.msra.mxu0 0
        %1073 = vmatprep.subr.bf16.mxu0 0
        %1074 = vmatpush1.bf16.msra.mxu0 0
        %1075 = vmatprep.subr.bf16.mxu0 0
        %1076 = vmatpush1.bf16.msra.mxu0 0
        %1077 = vmatprep.mubr.bf16.mxu0 0
        %1078 = vmatmul.mubr.bf16.gmra.mrb[0].mxu0 %v1040
        %v1079 = vpop.f32.mrb[0].mxu0
        %v1080 = vadd.f32 0.0, %v1079
        %v1081 = vpop.f32.mrb[0].mxu0
        %v1082 = vpop.f32.mrb[0].mxu0
        %v1083 = vpop.f32.mrb[0].mxu0
        %1084 = vdwg.mxu0
        %1086 = vrot.lane.b32.xlu0 %v984, 8
        %v1087 = vpop.permute.xlu0 %1086
        %1090 = vrot.lane.b32.xlu0 %v1032, 16
        %v1091 = vpop.permute.xlu0 %1090
        %1094 = vrot.lane.b32.xlu0 %v1080, 24
        %v1095 = vpop.permute.xlu0 %1094
        %v1097 = vsel %vm650, %v936, %v1087
        %vm1098 = vcmask 130048
        %v1099 = vsel %vm1098, %v1097, %v1091
        %vm1100 = vcmask 195584
        %v1101 = vsel %vm1100, %v1099, %v1095
        %v1102 = vld [vmem:[%s485] sm:$0x3f]
        %v1103 = vpack.c.bf16 %v1101, %v1101
        %v1104 = vld [vmem:[%s450] sm:$0xf]
        %v1105 = vld [vmem:[%s450 + $0x4] sm:$0xf]
        %v1106 = vld [vmem:[%s450 + $0x8] sm:$0xf]
        %v1107 = vld [vmem:[%s450 + $0xc] sm:$0xf]
        %v1108 = vlaneseq
        %v1109 = vshrl.u32 %v1108, 7
        %v1110 = vsub.s32 0, %v1109
        %v1111 = vrot.slane %v1102, %v1110
        %v1116 = vunpack.c.l.b16 %v1104
        %v1117 = vunpack.c.l.b16 %v1105
        %v1118 = vunpack.c.l.b16 %v1106
        %v1119 = vunpack.c.l.b16 %v1107
        %v1120 = vpack.c.b16 %v1117, %v1116
        %v1121 = vpack.c.b16 %v1119, %v1118
        %v1125 = vsel %vm574, %v1103, 0
        %1127 = vmatprep.subr.bf16.mxu0 0
        %1128 = vmatpush1.bf16.msra.mxu0 %v1120
        %1129 = vmatprep.subr.bf16.mxu0 0
        %1130 = vmatpush1.bf16.msra.mxu0 %v1121
        %1131 = vmatprep.subr.bf16.mxu0 0
        %1132 = vmatpush1.bf16.msra.mxu0 0
        %1133 = vmatprep.subr.bf16.mxu0 0
        %1134 = vmatpush1.bf16.msra.mxu0 0
        %1135 = vmatprep.subr.bf16.mxu0 0
        %1136 = vmatpush1.bf16.msra.mxu0 0
        %1137 = vmatprep.subr.bf16.mxu0 0
        %1138 = vmatpush1.bf16.msra.mxu0 0
        %1139 = vmatprep.subr.bf16.mxu0 0
        %1140 = vmatpush1.bf16.msra.mxu0 0
        %1141 = vmatprep.subr.bf16.mxu0 0
        %1142 = vmatpush1.bf16.msra.mxu0 0
        %1143 = vmatprep.subr.bf16.mxu0 0
        %1144 = vmatpush1.bf16.msra.mxu0 0
        %1145 = vmatprep.subr.bf16.mxu0 0
        %1146 = vmatpush1.bf16.msra.mxu0 0
        %1147 = vmatprep.subr.bf16.mxu0 0
        %1148 = vmatpush1.bf16.msra.mxu0 0
        %1149 = vmatprep.subr.bf16.mxu0 0
        %1150 = vmatpush1.bf16.msra.mxu0 0
        %1151 = vmatprep.subr.bf16.mxu0 0
        %1152 = vmatpush1.bf16.msra.mxu0 0
        %1153 = vmatprep.subr.bf16.mxu0 0
        %1154 = vmatpush1.bf16.msra.mxu0 0
        %1155 = vmatprep.subr.bf16.mxu0 0
        %1156 = vmatpush1.bf16.msra.mxu0 0
        %1157 = vmatprep.subr.bf16.mxu0 0
        %1158 = vmatpush1.bf16.msra.mxu0 0
        %1159 = vmatprep.mubr.bf16.mxu0 0
        %1160 = vmatmul.mubr.bf16.gmra.mrb[0].mxu0 %v1125
        %v1161 = vpop.f32.mrb[0].mxu0
        %v1162 = vadd.f32 %v1111, %v1161
        %v1163 = vpop.f32.mrb[0].mxu0
        %v1164 = vpop.f32.mrb[0].mxu0
        %v1165 = vpop.f32.mrb[0].mxu0
        %1166 = vdwg.mxu0
        %v1167 = vadd.f32 %v549, %v1162
        %v1168 = vsel %vm574, %v1167, 0.0
        %1169 = vadd.xlane.f32.xlu0 %v1168
        %v1170 = vpop.xlane.xlu0 %1169
        %v1171 = vrcp.pop 32.0
        %v1172 = vmul.f32 %v1170, %v1171
        %v1173 = vsub.f32 %v1167, %v1172
        %v1174 = vmul.f32 %v1173, %v1173
        %v1175 = vsel %vm574, %v1174, 0.0
        %1176 = vadd.xlane.f32.xlu0 %v1175
        %v1177 = vpop.xlane.xlu0 %1176
        %v1178 = vmul.f32 %v1177, %v1171
        %v1179 = vadd.f32 %v1178, 1e-05
        %v1180 = vrsqrt.pop %v1179
        %v1181 = vmul.f32 %v1173, %v1180
        %v1182 = vlaneseq
        %v1183 = vshrl.u32 %v1182, 7
        %v1184 = vsub.s32 2, %v1183
        %v1185 = vrot.slane %v1102, %v1184
        %v1186 = vmul.f32 %v1181, %v1185
        %v1187 = vlaneseq
        %v1188 = vshrl.u32 %v1187, 7
        %v1189 = vsub.s32 3, %v1188
        %v1190 = vrot.slane %v1102, %v1189
        %v1191 = vadd.f32 %v1186, %v1190
        %v1192 = vpack.c.bf16 %v1191, %v1191
        %v1193 = vld [vmem:[%s459] sm:$0xf]
        %v1194 = vld [vmem:[%s459 + $0x4] sm:$0xf]
        %v1195 = vld [vmem:[%s459 + $0x8] sm:$0xf]
        %v1196 = vld [vmem:[%s459 + $0xc] sm:$0xf]
        %v1197 = vld [vmem:[%s467] sm:$0x1]
        %v1199 = vlaneseq
        %v1200 = vshrl.u32 %v1199, 7
        %v1201 = vsub.s32 0, %v1200
        %v1202 = vrot.slane %v1197, %v1201
        %v1208 = vunpack.c.l.b16 %v1193
        %v1209 = vunpack.c.l.b16 %v1194
        %v1210 = vunpack.c.l.b16 %v1195
        %v1211 = vunpack.c.l.b16 %v1196
        %v1212 = vpack.c.b16 %v1209, %v1208
        %v1213 = vpack.c.b16 %v1211, %v1210
        %v1217 = vsel %vm574, %v1192, 0
        %1219 = vmatprep.subr.bf16.mxu0 0
        %1220 = vmatpush1.bf16.msra.mxu0 %v1212
        %1221 = vmatprep.subr.bf16.mxu0 0
        %1222 = vmatpush1.bf16.msra.mxu0 %v1213
        %1223 = vmatprep.subr.bf16.mxu0 0
        %1224 = vmatpush1.bf16.msra.mxu0 0
        %1225 = vmatprep.subr.bf16.mxu0 0
        %1226 = vmatpush1.bf16.msra.mxu0 0
        %1227 = vmatprep.subr.bf16.mxu0 0
        %1228 = vmatpush1.bf16.msra.mxu0 0
        %1229 = vmatprep.subr.bf16.mxu0 0
        %1230 = vmatpush1.bf16.msra.mxu0 0
        %1231 = vmatprep.subr.bf16.mxu0 0
        %1232 = vmatpush1.bf16.msra.mxu0 0
        %1233 = vmatprep.subr.bf16.mxu0 0
        %1234 = vmatpush1.bf16.msra.mxu0 0
        %1235 = vmatprep.subr.bf16.mxu0 0
        %1236 = vmatpush1.bf16.msra.mxu0 0
        %1237 = vmatprep.subr.bf16.mxu0 0
        %1238 = vmatpush1.bf16.msra.mxu0 0
        %1239 = vmatprep.subr.bf16.mxu0 0
        %1240 = vmatpush1.bf16.msra.mxu0 0
        %1241 = vmatprep.subr.bf16.mxu0 0
        %1242 = vmatpush1.bf16.msra.mxu0 0
        %1243 = vmatprep.subr.bf16.mxu0 0
        %1244 = vmatpush1.bf16.msra.mxu0 0
        %1245 = vmatprep.subr.bf16.mxu0 0
        %1246 = vmatpush1.bf16.msra.mxu0 0
        %1247 = vmatprep.subr.bf16.mxu0 0
        %1248 = vmatpush1.bf16.msra.mxu0 0
        %1249 = vmatprep.subr.bf16.mxu0 0
        %1250 = vmatpush1.bf16.msra.mxu0 0
        %1251 = vmatprep.mubr.bf16.mxu0 0
        %1252 = vmatmul.mubr.bf16.gmra.mrb[0].mxu0 %v1217
        %v1253 = vpop.f32.mrb[0].mxu0
        %v1254 = vadd.f32 %v1202, %v1253
        %v1255 = vpop.f32.mrb[0].mxu0
        %v1256 = vpop.f32.mrb[0].mxu0
        %v1257 = vpop.f32.mrb[0].mxu0
        %1258 = vdwg.mxu0
        %v1259 = vmax.f32 %v1254, 0.0
        %v1260 = vpack.c.bf16 %v1259, %v1259
        %v1261 = vld [vmem:[%s476] sm:$0xf]
        %v1262 = vld [vmem:[%s476 + $0x4] sm:$0xf]
        %v1263 = vld [vmem:[%s476 + $0x8] sm:$0xf]
        %v1264 = vld [vmem:[%s476 + $0xc] sm:$0xf]
        %v1265 = vld [vmem:[%s476 + $0x10] sm:$0xf]
        %v1266 = vld [vmem:[%s476 + $0x14] sm:$0xf]
        %v1267 = vld [vmem:[%s476 + $0x18] sm:$0xf]
        %v1268 = vld [vmem:[%s476 + $0x1c] sm:$0xf]
        %v1269 = vlaneseq
        %v1270 = vshrl.u32 %v1269, 7
        %v1271 = vsub.s32 1, %v1270
        %v1272 = vrot.slane %v1102, %v1271
        %v1281 = vunpack.c.l.b16 %v1261
        %v1282 = vunpack.c.l.b16 %v1262
        %v1283 = vunpack.c.l.b16 %v1263
        %v1284 = vunpack.c.l.b16 %v1264
        %v1285 = vunpack.c.l.b16 %v1265
        %v1286 = vunpack.c.l.b16 %v1266
        %v1287 = vunpack.c.l.b16 %v1267
        %v1288 = vunpack.c.l.b16 %v1268
        %v1289 = vpack.c.b16 %v1282, %v1281
        %v1290 = vpack.c.b16 %v1284, %v1283
        %v1291 = vpack.c.b16 %v1286, %v1285
        %v1292 = vpack.c.b16 %v1288, %v1287
        %vm1297 = vcmask 523264
        %v1299 = vsel %vm1297, %v1260, 0
        %1301 = vmatprep.subr.bf16.mxu0 0
        %1302 = vmatpush1.bf16.msra.mxu0 %v1289
        %1303 = vmatprep.subr.bf16.mxu0 0
        %1304 = vmatpush1.bf16.msra.mxu0 %v1290
        %1305 = vmatprep.subr.bf16.mxu0 0
        %1306 = vmatpush1.bf16.msra.mxu0 %v1291
        %1307 = vmatprep.subr.bf16.mxu0 0
        %1308 = vmatpush1.bf16.msra.mxu0 %v1292
        %1309 = vmatprep.subr.bf16.mxu0 0
        %1310 = vmatpush1.bf16.msra.mxu0 0
        %1311 = vmatprep.subr.bf16.mxu0 0
        %1312 = vmatpush1.bf16.msra.mxu0 0
        %1313 = vmatprep.subr.bf16.mxu0 0
        %1314 = vmatpush1.bf16.msra.mxu0 0
        %1315 = vmatprep.subr.bf16.mxu0 0
        %1316 = vmatpush1.bf16.msra.mxu0 0
        %1317 = vmatprep.subr.bf16.mxu0 0
        %1318 = vmatpush1.bf16.msra.mxu0 0
        %1319 = vmatprep.subr.bf16.mxu0 0
        %1320 = vmatpush1.bf16.msra.mxu0 0
        %1321 = vmatprep.subr.bf16.mxu0 0
        %1322 = vmatpush1.bf16.msra.mxu0 0
        %1323 = vmatprep.subr.bf16.mxu0 0
        %1324 = vmatpush1.bf16.msra.mxu0 0
        %1325 = vmatprep.subr.bf16.mxu0 0
        %1326 = vmatpush1.bf16.msra.mxu0 0
        %1327 = vmatprep.subr.bf16.mxu0 0
        %1328 = vmatpush1.bf16.msra.mxu0 0
        %1329 = vmatprep.subr.bf16.mxu0 0
        %1330 = vmatpush1.bf16.msra.mxu0 0
        %1331 = vmatprep.subr.bf16.mxu0 0
        %1332 = vmatpush1.bf16.msra.mxu0 0
        %1333 = vmatprep.mubr.bf16.mxu0 0
        %1334 = vmatmul.mubr.bf16.gmra.mrb[0].mxu0 %v1299
        %v1335 = vpop.f32.mrb[0].mxu0
        %v1336 = vadd.f32 %v1272, %v1335
        %v1337 = vpop.f32.mrb[0].mxu0
        %v1338 = vpop.f32.mrb[0].mxu0
        %v1339 = vpop.f32.mrb[0].mxu0
        %1340 = vdwg.mxu0
        %v1341 = vadd.f32 %v1191, %v1336
        %v1342 = vsel %vm574, %v1341, 0.0
        %1343 = vadd.xlane.f32.xlu0 %v1342
        %v1344 = vpop.xlane.xlu0 %1343
        %v1345 = vmul.f32 %v1344, %v1171
        %v1346 = vsub.f32 %v1341, %v1345
        %v1347 = vmul.f32 %v1346, %v1346
        %v1348 = vsel %vm574, %v1347, 0.0
        %1349 = vadd.xlane.f32.xlu0 %v1348
        %v1350 = vpop.xlane.xlu0 %1349
        %v1351 = vmul.f32 %v1350, %v1171
        %v1352 = vadd.f32 %v1351, 1e-05
        %v1353 = vrsqrt.pop %v1352
        %v1354 = vmul.f32 %v1346, %v1353
        %v1355 = vlaneseq
        %v1356 = vshrl.u32 %v1355, 7
        %v1357 = vsub.s32 4, %v1356
        %v1358 = vrot.slane %v1102, %v1357
        %v1359 = vmul.f32 %v1354, %v1358
        %v1360 = vlaneseq
        %v1361 = vshrl.u32 %v1360, 7
        %v1362 = vsub.s32 5, %v1361
        %v1363 = vrot.slane %v1102, %v1362
        %v1364 = vadd.f32 %v1359, %v1363
        %1365 = vst.msk [vmem:[#allocation16] sm:$0xff] %vm574, %v1364
        // Predicated region
        $region89: #{tpu_custom_call.1} parent=51 // pred_check
          %p1366 = pneg %p249
        $region90: #{tpu_custom_call.1} parent=51 // pred_check_branch
          %1368 = sbr.rel (%p1366) target = $region92
        $region91: #{tpu_custom_call.1} parent=51 // pred_region
          %s1370 = ssub.s32 128, 128
          %1371 = vsyncadd [#allocation4], %s1370
          %s1373 = sshll.u32 [#allocation16], 4
          %s1374 = int_to_ptr.vmem [resolvable:$true] %s1373
          %1376 = dma.vmem_to_hbm [thread:$0]  %s1374, 128, %s8, [#allocation4]
        $region92: #{tpu_custom_call.1} parent=51 // pred_fallthru
          _
        // Predicated region
        $region93: #{tpu_custom_call.1} parent=51 // pred_check
          %p1377 = pneg %p249
        $region94: #{tpu_custom_call.1} parent=51 // pred_check_branch
          %1379 = sbr.rel (%p1377) target = $region96
        $region95: #{tpu_custom_call.1} parent=51 // pred_region
          %1380 = dma.done [#allocation4], 128
        $region96: #{tpu_custom_call.1} parent=51 // pred_fallthru
          _
      $region52: #{tpu_custom_call.1} parent=5 // pred_fallthru
        _
      %p1381 = scmp.le.s32.totalorder 2, %s28
      // Predicated region
      $region97: #{tpu_custom_call.1} parent=5 // pred_check
        %p1382 = pneg %p1381
      $region98: #{tpu_custom_call.1} parent=5 // pred_check_branch
        %1384 = sbr.rel (%p1382) target = $region100
      $region99: #{tpu_custom_call.1} parent=5 // pred_region
        %s1385 = ssub.s32 %s28, 2
      $region100: #{tpu_custom_call.1} parent=5 // pred_fallthru
        _
    $region6: #{tpu_custom_call.1} parent=1 // loop_footer
      %s32 = sadd.s32 1, %s28
    $region7: #{tpu_custom_call.1} parent=1 // loop_footer_branch
      %27 = sbr.rel target = $region3
    $region8: #{tpu_custom_call.1} parent=1 // loop_exit
      _
    %1386 = vsyncpa [#allocation3], 1
    %s1387 = scalar_lea.sflag [#allocation3], 1
    %1388 = vsyncpa %s1387, 1
    %1389 = vsyncpa [#allocation6], 1
    %s1390 = scalar_lea.sflag [#allocation6], 1
    %1391 = vsyncpa %s1390, 1
    %1392 = vsyncpa [#allocation9], 1
    %s1393 = scalar_lea.sflag [#allocation9], 1
    %1394 = vsyncpa %s1393, 1
    %1395 = vsyncpa [#allocation12], 1
    %s1396 = scalar_lea.sflag [#allocation12], 1
    %1397 = vsyncpa %s1396, 1
    %1398 = vsyncpa [#allocation15], 1
    %s1399 = scalar_lea.sflag [#allocation15], 1
    %1400 = vsyncpa %s1399, 1
    %1401 = vsyncpa [#allocation4], 1
    %s1402 = scalar_lea.sflag [#allocation4], 1
    %1403 = vsyncpa %s1402, 1

</llo_original>
